<compile_context>
chip_gen: v7x
topology: tpu7x:2x2x1
jax: 0.10.0
libtpu: 0.0.40
codegen_flags: <defaults>
</compile_context>

<pallas_src>
import functools

import numpy as np
import jax
import jax.numpy as jnp
from jax.experimental import pallas as pl
from jax.experimental.pallas import tpu as pltpu

BN_EPS = 1e-5
BLOCK = 128   # per-batch lane stride: each batch element owns one 128-lane block in every slab
PAD = 2       # Conv1d padding (kernel_size=5, stride=1 -> conv output length == input length)


def _fused_kernel(x_ref, w_ref, bn_ref, sel_ref, o_ref, p_ref, *, lcs, ksize, c_out, n_batch):
    """Fused 4-layer CNN feature extractor.

    x_ref   : (C, N*128) f32   layer-1 padded slab (batch n at lanes [n*128, n*128+128))
    w_ref   : (n_layers*K*C, C) bf16   packed conv weights, layer l at rows [l*K*C, (l+1)*K*C),
                                       tap-k block at rows k*C .. k*C+C-1 (columns = input channels)
    bn_ref  : (C, 2*n_layers) f32      column 2l = gamma_l, 2l+1 = beta_l
    sel_ref : (N*128, 2*N*128) bf16    shared pooling selector: [even-gather | odd-gather], pooled
                                       column j of batch n routed to lane n*128 + PAD + j
    o_ref   : (C, N*128) f32           last layer's slab (lane-dense store)
    p_ref   : (K*C, N*128 + 128) f32   scratch for the shifted tap windows (zero tail)
    """
    n_layers = len(lcs)
    kco = ksize * c_out
    w_lanes = n_batch * BLOCK

    # Zero the scratch's spill tail once: tap window k reads lanes [k, k + W), i.e. up to K-1 lanes
    # past W.  Keeping them zero keeps those (masked-anyway) columns finite and well defined.
    p_ref[:, w_lanes:w_lanes + BLOCK] = jnp.zeros((kco, BLOCK), jnp.float32)

    # Hoisted constants: within-block lane position (BLOCK is a power of two) and the BN table.
    lane = jax.lax.broadcasted_iota(jnp.int32, (1, w_lanes), 1)
    jb = jnp.bitwise_and(lane, BLOCK - 1)                     # lane % 128
    bn = bn_ref[...]                                          # (C, 2*n_layers) f32
    sel = sel_ref[...]                                        # (W, 2W) bf16, shared by all layers

    slab = x_ref[...].astype(jnp.bfloat16)                    # (C, W) layer-1 padded slab

    for li in range(n_layers):
        lc = lcs[li]                                          # valid conv output length this layer

        # ---- Conv1d: ONE MXU matmul per layer.  P[k*C + co, q] = (W_k @ x_pad)[co, q]; the conv is
        #      conv[co, j] = sum_k P[k*C + co, j + k], i.e. K sublane-aligned row blocks each
        #      left-shifted by k lanes.  The shift is a static shifted-window read of the scratch
        #      (wrap-free roll with zero fill).  Conv bias omitted: cancels under train-mode BN. ----
        p = jnp.dot(w_ref[li * kco:(li + 1) * kco, :], slab,
                    preferred_element_type=jnp.float32)       # (K*C, W) f32
        p_ref[c_out:kco, 0:w_lanes] = p[c_out:kco, :]         # taps 1..K-1 go through the scratch
        conv = p[0:c_out, :]                                  # tap 0 needs no shift
        for k in range(1, ksize):
            conv = conv + p_ref[k * c_out:(k + 1) * c_out, k:k + w_lanes]

        # ---- BatchNorm1d (training-mode batch stats, biased variance), two-pass fp32.  Columns at
        #      within-block position >= Lc are junk (cross-block / halo spill) and are masked out
        #      of the statistics and zeroed before the pooling matmul. ----
        valid = jb < lc                                       # (1, W) bool
        inv_n = 1.0 / float(n_batch * lc)
        mean = jnp.sum(jnp.where(valid, conv, 0.0), axis=1, keepdims=True) * inv_n
        cen = jnp.where(valid, conv - mean, 0.0)
        var = jnp.sum(cen * cen, axis=1, keepdims=True) * inv_n
        scale = jax.lax.rsqrt(var + BN_EPS) * bn[:, 2 * li:2 * li + 1]
        beta = bn[:, 2 * li + 1:2 * li + 2]
        ym = jnp.where(valid, cen * scale + beta, 0.0).astype(jnp.bfloat16)

        # ---- MaxPool1d(2,2): one fused selector matmul ([even | odd]), max of the two 128-aligned
        #      halves, then the deferred ReLU (ReLU commutes with max and with the zero halo).  The
        #      selector already places pooled column j at lane n*128 + PAD + j, so this IS the next
        #      layer's padded slab. ----
        po = jnp.dot(ym, sel, preferred_element_type=jnp.float32)        # (C, 2W) f32
        pooled = jnp.maximum(po[:, 0:w_lanes], po[:, w_lanes:2 * w_lanes])
        slab = jnp.maximum(pooled, 0.0)
        if li + 1 < n_layers:
            slab = slab.astype(jnp.bfloat16)

    o_ref[...] = slab                                         # (C, N*128) f32, lane-dense store


def _build_selector(n_batch, lh_max, halo):
    """Shared 0/1 pooling selector: input lane n*128 + 2j (even half) / 2j+1 (odd half) routed to
    output lane n*128 + halo + j, for j < lh_max.  Deeper layers reuse it unchanged: their extra
    routed input columns are zeros (masked activations), so the halo/tail columns stay exact 0."""
    w = n_batch * BLOCK
    sel = np.zeros((w, 2 * w), np.float32)
    for n in range(n_batch):
        base = n * BLOCK
        for j in range(lh_max):
            sel[base + 2 * j, base + halo + j] = 1.0           # even gather
            sel[base + 2 * j + 1, w + base + halo + j] = 1.0   # odd gather
    return sel


@jax.jit
def feature_extractor_cnn(x, params):
    """Forward pass of FeatureExtractor_CNN. x: (N, C_in, L); params: [(w, b, gamma, beta)] * 4."""
    N, C_in, L = x.shape
    c_out, _, K = params[0][0].shape
    n_layers = len(params)

    assert 2 * PAD + L <= BLOCK, "sequence (plus conv halo) must fit one 128-lane block per batch"
    assert L % (2 ** n_layers) == 0, "pooled lengths must stay even for the shared selector"
    assert C_in <= c_out

    lcs = [L // (2 ** i) for i in range(n_layers)]    # conv output length per layer: 64,32,16,8
    lh_last = lcs[-1] // 2
    lh_max = lcs[0] // 2

    # Layer-1 slab: (C, N*128), batch n's padded signal at lanes [n*128 + PAD, n*128 + PAD + L),
    # input channels padded up to C with zero rows (so every layer uses the same W_stack shape).
    x_slab = jnp.zeros((c_out, N, BLOCK), jnp.float32)
    x_slab = x_slab.at[:C_in, :, PAD:PAD + L].set(jnp.transpose(x.astype(jnp.float32), (1, 0, 2)))
    x_slab = x_slab.reshape(c_out, N * BLOCK)

    # Packed conv weights: row l*K*C + k*C + co, col c = w_l[co, c, k]  (conv bias dropped: it
    # cancels exactly under training-mode BatchNorm).
    w_rows = []
    for (w, _b, _g, _be) in params:
        co, ci, k = w.shape
        wl = jnp.zeros((k * co, c_out), jnp.float32)
        wl = wl.at[:, :ci].set(jnp.transpose(w.astype(jnp.float32), (2, 0, 1)).reshape(k * co, ci))
        w_rows.append(wl)
    w_all = jnp.concatenate(w_rows, axis=0).astype(jnp.bfloat16)          # (n_layers*K*C, C)

    # Packed BN params: (C, 2*n_layers), col 2l = gamma, 2l+1 = beta.
    bn_cols = []
    for (_w, _b, g, be) in params:
        bn_cols += [g.reshape(-1, 1), be.reshape(-1, 1)]
    bn_all = jnp.concatenate(bn_cols, axis=1).astype(jnp.float32)

    # Shared pooling selector (trace-time constant under jit).
    sel = jnp.asarray(_build_selector(N, lh_max, PAD), jnp.bfloat16)      # (W, 2W)

    vmem = pl.BlockSpec(memory_space=pltpu.MemorySpace.VMEM)
    kernel = functools.partial(_fused_kernel, lcs=tuple(lcs), ksize=K, c_out=c_out, n_batch=N)
    out_slab = pl.pallas_call(
        kernel,
        out_shape=jax.ShapeDtypeStruct((c_out, N * BLOCK), jnp.float32),
        in_specs=[vmem] * 4,
        out_specs=vmem,
        scratch_shapes=[pltpu.VMEM((K * c_out, N * BLOCK + BLOCK), jnp.float32)],
        # TODO(synk): if many independent sequences are processed per call, add a leading grid axis
        # with dimension_semantics=("parallel",) so the two v7x TensorCores split the work.
    )(x_slab, w_all, bn_all, sel)

    # (C, N*128) -> (N, C*Lh_last): identical ordering to torch's out.reshape(N, -1).
    out = out_slab.reshape(c_out, N, BLOCK)[:, :, PAD:PAD + lh_last]      # (C, N, Lh)
    return jnp.transpose(out, (1, 0, 2)).reshape(N, c_out * lh_last)


def ref_forward(x, params):
    """Pure-JAX reference (mirrors the PyTorch module with training-mode BN, fp32, incl. conv bias)."""
    out = x.astype(jnp.float32)
    for (w, b, g, be) in params:
        y = jax.lax.conv_general_dilated(
            out, w, window_strides=(1,), padding=((PAD, PAD),),
            dimension_numbers=("NCH", "OIH", "NCH"),
            precision=jax.lax.Precision.HIGHEST)
        y = y + b[None, :, None]
        mean = y.mean(axis=(0, 2), keepdims=True)
        var = ((y - mean) ** 2).mean(axis=(0, 2), keepdims=True)
        y = (y - mean) / jnp.sqrt(var + BN_EPS)
        y = y * g[None, :, None] + be[None, :, None]
        y = jnp.maximum(y, 0.0)
        lh = y.shape[2] // 2
        y = y[:, :, : lh * 2].reshape(y.shape[0], y.shape[1], lh, 2).max(axis=-1)
        out = y
    return out.reshape(out.shape[0], -1)


if __name__ == "__main__":
    # training_params equivalent: data_dimensions=(4, 64), channel_n=8, kernel_size=5
    N, C_in, L = 2, 4, 64
    channel_n, kernel_size = 8, 5

    key = jax.random.PRNGKey(0)
    keys = jax.random.split(key, 1 + 4 * 4)
    x = jax.random.normal(keys[0], (N, C_in, L), jnp.float32)

    params = []
    cin = C_in
    ki = 1
    for _layer in range(4):
        fan_in = cin * kernel_size
        bound = 1.0 / (fan_in ** 0.5)
        w = jax.random.uniform(keys[ki], (channel_n, cin, kernel_size), jnp.float32, -bound, bound); ki += 1
        b = jax.random.uniform(keys[ki], (channel_n,), jnp.float32, -bound, bound); ki += 1
        g = jax.random.uniform(keys[ki], (channel_n,), jnp.float32, 0.5, 1.5); ki += 1
        be = 0.1 * jax.random.normal(keys[ki], (channel_n,), jnp.float32); ki += 1
        params.append((w, b, g, be))
        cin = channel_n

    out = jax.block_until_ready(feature_extractor_cnn(x, params))
    ref = jax.block_until_ready(ref_forward(x, params))

    # feature_out_dim = channel_n * (L // 2**4) = 8 * 4 = 32
    assert out.shape == (N, channel_n * (L // 16)), out.shape
    # Tolerance covers the bf16 MXU operands (reference runs in fp32 HIGHEST precision).
    if not jnp.allclose(out, ref, rtol=3e-2, atol=3e-2):
        raise AssertionError("Pallas kernel output does not match reference")
    print("KERNEL_OK")
</pallas_src>

<mosaic_0001>
module attributes {stable_mosaic.version = 11 : i64} {
  func.func @_fused_kernel(%arg0: memref<8x256xf32, #tpu.memory_space<vmem>>, %arg1: memref<160x8xbf16, #tpu.memory_space<vmem>>, %arg2: memref<8x8xf32, #tpu.memory_space<vmem>>, %arg3: memref<256x512xbf16, #tpu.memory_space<vmem>>, %arg4: memref<8x256xf32, #tpu.memory_space<vmem>>, %arg5: memref<40x384xf32, #tpu.memory_space<vmem>>) attributes {dimension_semantics = [], scalar_prefetch = 0 : i64, scratch_operands = 1 : i64, tpu.core_type = #tpu.core_type<tc>} {
    %cst = arith.constant 0.000000e+00 : f32
    %0 = vector.broadcast %cst : f32 to vector<40x128xf32>
    %c0 = arith.constant 0 : index
    %c256 = arith.constant 256 : index
    %1 = vector.load %arg5[%c0, %c256] : memref<40x384xf32, #tpu.memory_space<vmem>>, vector<40x128xf32>
    tpu.vector_store %arg5[%c0, %c256], %0 {strides = array<i32>} : memref<40x384xf32, #tpu.memory_space<vmem>>, vector<40x128xf32>,
    %2 = tpu.iota {dimensions = array<i32: 1>} : vector<1x256xi32>
    %c127_i32 = arith.constant 127 : i32
    %3 = vector.broadcast %c127_i32 : i32 to vector<1x256xi32>
    %4 = arith.andi %2, %3 : vector<1x256xi32>
    %c0_0 = arith.constant 0 : index
    %c0_1 = arith.constant 0 : index
    %5 = vector.load %arg2[%c0_0, %c0_1] : memref<8x8xf32, #tpu.memory_space<vmem>>, vector<8x8xf32>
    %c0_2 = arith.constant 0 : index
    %c0_3 = arith.constant 0 : index
    %6 = vector.load %arg3[%c0_2, %c0_3] : memref<256x512xbf16, #tpu.memory_space<vmem>>, vector<256x512xbf16>
    %c0_4 = arith.constant 0 : index
    %c0_5 = arith.constant 0 : index
    %7 = vector.load %arg0[%c0_4, %c0_5] : memref<8x256xf32, #tpu.memory_space<vmem>>, vector<8x256xf32>
    %8 = arith.truncf %7 : vector<8x256xf32> to vector<8x256xbf16>
    %c0_6 = arith.constant 0 : index
    %c0_7 = arith.constant 0 : index
    %9 = vector.load %arg1[%c0_6, %c0_7] : memref<160x8xbf16, #tpu.memory_space<vmem>>, vector<40x8xbf16>
    %cst_8 = arith.constant dense<0.000000e+00> : vector<40x256xf32>
    %10 = tpu.matmul %9, %8, %cst_8 {dimension_numbers = #tpu.dot_dimension_numbers<[1], [0], [0], [1], [0, 0, 1, 1], [], []>} : vector<40x8xbf16>, vector<8x256xbf16>, vector<40x256xf32> -> vector<40x256xf32>
    %11 = vector.extract_strided_slice %10 {offsets = [8, 0], sizes = [32, 256], strides = [1, 1]} : vector<40x256xf32> to vector<32x256xf32>
    %c8 = arith.constant 8 : index
    %c0_9 = arith.constant 0 : index
    %12 = vector.load %arg5[%c8, %c0_9] : memref<40x384xf32, #tpu.memory_space<vmem>>, vector<32x256xf32>
    tpu.vector_store %arg5[%c8, %c0_9], %11 {strides = array<i32>} : memref<40x384xf32, #tpu.memory_space<vmem>>, vector<32x256xf32>,
    %13 = vector.extract_strided_slice %10 {offsets = [0, 0], sizes = [8, 256], strides = [1, 1]} : vector<40x256xf32> to vector<8x256xf32>
    %c8_10 = arith.constant 8 : index
    %c1 = arith.constant 1 : index
    %14 = vector.load %arg5[%c8_10, %c1] : memref<40x384xf32, #tpu.memory_space<vmem>>, vector<8x256xf32>
    %15 = arith.addf %13, %14 : vector<8x256xf32>
    %c16 = arith.constant 16 : index
    %c2 = arith.constant 2 : index
    %16 = vector.load %arg5[%c16, %c2] : memref<40x384xf32, #tpu.memory_space<vmem>>, vector<8x256xf32>
    %17 = arith.addf %15, %16 : vector<8x256xf32>
    %c24 = arith.constant 24 : index
    %c3 = arith.constant 3 : index
    %18 = vector.load %arg5[%c24, %c3] : memref<40x384xf32, #tpu.memory_space<vmem>>, vector<8x256xf32>
    %19 = arith.addf %17, %18 : vector<8x256xf32>
    %c32 = arith.constant 32 : index
    %c4 = arith.constant 4 : index
    %20 = vector.load %arg5[%c32, %c4] : memref<40x384xf32, #tpu.memory_space<vmem>>, vector<8x256xf32>
    %21 = arith.addf %19, %20 : vector<8x256xf32>
    %c64_i32 = arith.constant 64 : i32
    %22 = vector.broadcast %c64_i32 : i32 to vector<1x256xi32>
    %23 = arith.cmpi slt, %4, %22 : vector<1x256xi32>
    %cst_11 = arith.constant 0.000000e+00 : f32
    %24 = vector.shape_cast %23 : vector<1x256xi1> to vector<1x256xi1>
    %25 = vector.broadcast %24 : vector<1x256xi1> to vector<8x256xi1>
    %26 = vector.broadcast %cst_11 : f32 to vector<8x256xf32>
    %27 = arith.select %25, %21, %26 : vector<8x256xi1>, vector<8x256xf32>
    %cst_12 = arith.constant dense<0.000000e+00> : vector<8xf32>
    %28 = vector.multi_reduction <add>, %27, %cst_12 [1] : vector<8x256xf32> to vector<8xf32>
    %29 = vector.shape_cast %28 : vector<8xf32> to vector<8x1xf32>
    %cst_13 = arith.constant 7.812500e-03 : f32
    %30 = vector.broadcast %cst_13 : f32 to vector<8x1xf32>
    %31 = arith.mulf %29, %30 : vector<8x1xf32>
    %32 = vector.broadcast %31 : vector<8x1xf32> to vector<8x256xf32>
    %33 = arith.subf %21, %32 : vector<8x256xf32>
    %cst_14 = arith.constant 0.000000e+00 : f32
    %34 = vector.shape_cast %23 : vector<1x256xi1> to vector<1x256xi1>
    %35 = vector.broadcast %34 : vector<1x256xi1> to vector<8x256xi1>
    %36 = vector.broadcast %cst_14 : f32 to vector<8x256xf32>
    %37 = arith.select %35, %33, %36 : vector<8x256xi1>, vector<8x256xf32>
    %38 = arith.mulf %37, %37 : vector<8x256xf32>
    %cst_15 = arith.constant dense<0.000000e+00> : vector<8xf32>
    %39 = vector.multi_reduction <add>, %38, %cst_15 [1] : vector<8x256xf32> to vector<8xf32>
    %40 = vector.shape_cast %39 : vector<8xf32> to vector<8x1xf32>
    %cst_16 = arith.constant 7.812500e-03 : f32
    %41 = vector.broadcast %cst_16 : f32 to vector<8x1xf32>
    %42 = arith.mulf %40, %41 : vector<8x1xf32>
    %cst_17 = arith.constant 9.99999974E-6 : f32
    %43 = vector.broadcast %cst_17 : f32 to vector<8x1xf32>
    %44 = arith.addf %42, %43 : vector<8x1xf32>
    %45 = math.rsqrt %44 : vector<8x1xf32>
    %46 = vector.extract_strided_slice %5 {offsets = [0, 0], sizes = [8, 1], strides = [1, 1]} : vector<8x8xf32> to vector<8x1xf32>
    %47 = arith.mulf %45, %46 : vector<8x1xf32>
    %48 = vector.extract_strided_slice %5 {offsets = [0, 1], sizes = [8, 1], strides = [1, 1]} : vector<8x8xf32> to vector<8x1xf32>
    %49 = vector.broadcast %47 : vector<8x1xf32> to vector<8x256xf32>
    %50 = arith.mulf %37, %49 : vector<8x256xf32>
    %51 = vector.broadcast %48 : vector<8x1xf32> to vector<8x256xf32>
    %52 = arith.addf %50, %51 : vector<8x256xf32>
    %cst_18 = arith.constant 0.000000e+00 : f32
    %53 = vector.shape_cast %23 : vector<1x256xi1> to vector<1x256xi1>
    %54 = vector.broadcast %53 : vector<1x256xi1> to vector<8x256xi1>
    %55 = vector.broadcast %cst_18 : f32 to vector<8x256xf32>
    %56 = arith.select %54, %52, %55 : vector<8x256xi1>, vector<8x256xf32>
    %57 = arith.truncf %56 : vector<8x256xf32> to vector<8x256xbf16>
    %cst_19 = arith.constant dense<0.000000e+00> : vector<8x512xf32>
    %58 = tpu.matmul %57, %6, %cst_19 {dimension_numbers = #tpu.dot_dimension_numbers<[1], [0], [0], [1], [0, 0, 1, 1], [], []>} : vector<8x256xbf16>, vector<256x512xbf16>, vector<8x512xf32> -> vector<8x512xf32>
    %59 = vector.extract_strided_slice %58 {offsets = [0, 0], sizes = [8, 256], strides = [1, 1]} : vector<8x512xf32> to vector<8x256xf32>
    %60 = vector.extract_strided_slice %58 {offsets = [0, 256], sizes = [8, 256], strides = [1, 1]} : vector<8x512xf32> to vector<8x256xf32>
    %61 = arith.maximumf %59, %60 : vector<8x256xf32>
    %cst_20 = arith.constant 0.000000e+00 : f32
    %62 = vector.broadcast %cst_20 : f32 to vector<8x256xf32>
    %63 = arith.maximumf %61, %62 : vector<8x256xf32>
    %64 = arith.truncf %63 : vector<8x256xf32> to vector<8x256xbf16>
    %c40 = arith.constant 40 : index
    %c0_21 = arith.constant 0 : index
    %65 = vector.load %arg1[%c40, %c0_21] : memref<160x8xbf16, #tpu.memory_space<vmem>>, vector<40x8xbf16>
    %cst_22 = arith.constant dense<0.000000e+00> : vector<40x256xf32>
    %66 = tpu.matmul %65, %64, %cst_22 {dimension_numbers = #tpu.dot_dimension_numbers<[1], [0], [0], [1], [0, 0, 1, 1], [], []>} : vector<40x8xbf16>, vector<8x256xbf16>, vector<40x256xf32> -> vector<40x256xf32>
    %67 = vector.extract_strided_slice %66 {offsets = [8, 0], sizes = [32, 256], strides = [1, 1]} : vector<40x256xf32> to vector<32x256xf32>
    %c8_23 = arith.constant 8 : index
    %c0_24 = arith.constant 0 : index
    %68 = vector.load %arg5[%c8_23, %c0_24] : memref<40x384xf32, #tpu.memory_space<vmem>>, vector<32x256xf32>
    tpu.vector_store %arg5[%c8_23, %c0_24], %67 {strides = array<i32>} : memref<40x384xf32, #tpu.memory_space<vmem>>, vector<32x256xf32>,
    %69 = vector.extract_strided_slice %66 {offsets = [0, 0], sizes = [8, 256], strides = [1, 1]} : vector<40x256xf32> to vector<8x256xf32>
    %c8_25 = arith.constant 8 : index
    %c1_26 = arith.constant 1 : index
    %70 = vector.load %arg5[%c8_25, %c1_26] : memref<40x384xf32, #tpu.memory_space<vmem>>, vector<8x256xf32>
    %71 = arith.addf %69, %70 : vector<8x256xf32>
    %c16_27 = arith.constant 16 : index
    %c2_28 = arith.constant 2 : index
    %72 = vector.load %arg5[%c16_27, %c2_28] : memref<40x384xf32, #tpu.memory_space<vmem>>, vector<8x256xf32>
    %73 = arith.addf %71, %72 : vector<8x256xf32>
    %c24_29 = arith.constant 24 : index
    %c3_30 = arith.constant 3 : index
    %74 = vector.load %arg5[%c24_29, %c3_30] : memref<40x384xf32, #tpu.memory_space<vmem>>, vector<8x256xf32>
    %75 = arith.addf %73, %74 : vector<8x256xf32>
    %c32_31 = arith.constant 32 : index
    %c4_32 = arith.constant 4 : index
    %76 = vector.load %arg5[%c32_31, %c4_32] : memref<40x384xf32, #tpu.memory_space<vmem>>, vector<8x256xf32>
    %77 = arith.addf %75, %76 : vector<8x256xf32>
    %c32_i32 = arith.constant 32 : i32
    %78 = vector.broadcast %c32_i32 : i32 to vector<1x256xi32>
    %79 = arith.cmpi slt, %4, %78 : vector<1x256xi32>
    %cst_33 = arith.constant 0.000000e+00 : f32
    %80 = vector.shape_cast %79 : vector<1x256xi1> to vector<1x256xi1>
    %81 = vector.broadcast %80 : vector<1x256xi1> to vector<8x256xi1>
    %82 = vector.broadcast %cst_33 : f32 to vector<8x256xf32>
    %83 = arith.select %81, %77, %82 : vector<8x256xi1>, vector<8x256xf32>
    %cst_34 = arith.constant dense<0.000000e+00> : vector<8xf32>
    %84 = vector.multi_reduction <add>, %83, %cst_34 [1] : vector<8x256xf32> to vector<8xf32>
    %85 = vector.shape_cast %84 : vector<8xf32> to vector<8x1xf32>
    %cst_35 = arith.constant 1.562500e-02 : f32
    %86 = vector.broadcast %cst_35 : f32 to vector<8x1xf32>
    %87 = arith.mulf %85, %86 : vector<8x1xf32>
    %88 = vector.broadcast %87 : vector<8x1xf32> to vector<8x256xf32>
    %89 = arith.subf %77, %88 : vector<8x256xf32>
    %cst_36 = arith.constant 0.000000e+00 : f32
    %90 = vector.shape_cast %79 : vector<1x256xi1> to vector<1x256xi1>
    %91 = vector.broadcast %90 : vector<1x256xi1> to vector<8x256xi1>
    %92 = vector.broadcast %cst_36 : f32 to vector<8x256xf32>
    %93 = arith.select %91, %89, %92 : vector<8x256xi1>, vector<8x256xf32>
    %94 = arith.mulf %93, %93 : vector<8x256xf32>
    %cst_37 = arith.constant dense<0.000000e+00> : vector<8xf32>
    %95 = vector.multi_reduction <add>, %94, %cst_37 [1] : vector<8x256xf32> to vector<8xf32>
    %96 = vector.shape_cast %95 : vector<8xf32> to vector<8x1xf32>
    %cst_38 = arith.constant 1.562500e-02 : f32
    %97 = vector.broadcast %cst_38 : f32 to vector<8x1xf32>
    %98 = arith.mulf %96, %97 : vector<8x1xf32>
    %cst_39 = arith.constant 9.99999974E-6 : f32
    %99 = vector.broadcast %cst_39 : f32 to vector<8x1xf32>
    %100 = arith.addf %98, %99 : vector<8x1xf32>
    %101 = math.rsqrt %100 : vector<8x1xf32>
    %102 = vector.extract_strided_slice %5 {offsets = [0, 2], sizes = [8, 1], strides = [1, 1]} : vector<8x8xf32> to vector<8x1xf32>
    %103 = arith.mulf %101, %102 : vector<8x1xf32>
    %104 = vector.extract_strided_slice %5 {offsets = [0, 3], sizes = [8, 1], strides = [1, 1]} : vector<8x8xf32> to vector<8x1xf32>
    %105 = vector.broadcast %103 : vector<8x1xf32> to vector<8x256xf32>
    %106 = arith.mulf %93, %105 : vector<8x256xf32>
    %107 = vector.broadcast %104 : vector<8x1xf32> to vector<8x256xf32>
    %108 = arith.addf %106, %107 : vector<8x256xf32>
    %cst_40 = arith.constant 0.000000e+00 : f32
    %109 = vector.shape_cast %79 : vector<1x256xi1> to vector<1x256xi1>
    %110 = vector.broadcast %109 : vector<1x256xi1> to vector<8x256xi1>
    %111 = vector.broadcast %cst_40 : f32 to vector<8x256xf32>
    %112 = arith.select %110, %108, %111 : vector<8x256xi1>, vector<8x256xf32>
    %113 = arith.truncf %112 : vector<8x256xf32> to vector<8x256xbf16>
    %cst_41 = arith.constant dense<0.000000e+00> : vector<8x512xf32>
    %114 = tpu.matmul %113, %6, %cst_41 {dimension_numbers = #tpu.dot_dimension_numbers<[1], [0], [0], [1], [0, 0, 1, 1], [], []>} : vector<8x256xbf16>, vector<256x512xbf16>, vector<8x512xf32> -> vector<8x512xf32>
    %115 = vector.extract_strided_slice %114 {offsets = [0, 0], sizes = [8, 256], strides = [1, 1]} : vector<8x512xf32> to vector<8x256xf32>
    %116 = vector.extract_strided_slice %114 {offsets = [0, 256], sizes = [8, 256], strides = [1, 1]} : vector<8x512xf32> to vector<8x256xf32>
    %117 = arith.maximumf %115, %116 : vector<8x256xf32>
    %cst_42 = arith.constant 0.000000e+00 : f32
    %118 = vector.broadcast %cst_42 : f32 to vector<8x256xf32>
    %119 = arith.maximumf %117, %118 : vector<8x256xf32>
    %120 = arith.truncf %119 : vector<8x256xf32> to vector<8x256xbf16>
    %c80 = arith.constant 80 : index
    %c0_43 = arith.constant 0 : index
    %121 = vector.load %arg1[%c80, %c0_43] : memref<160x8xbf16, #tpu.memory_space<vmem>>, vector<40x8xbf16>
    %cst_44 = arith.constant dense<0.000000e+00> : vector<40x256xf32>
    %122 = tpu.matmul %121, %120, %cst_44 {dimension_numbers = #tpu.dot_dimension_numbers<[1], [0], [0], [1], [0, 0, 1, 1], [], []>} : vector<40x8xbf16>, vector<8x256xbf16>, vector<40x256xf32> -> vector<40x256xf32>
    %123 = vector.extract_strided_slice %122 {offsets = [8, 0], sizes = [32, 256], strides = [1, 1]} : vector<40x256xf32> to vector<32x256xf32>
    %c8_45 = arith.constant 8 : index
    %c0_46 = arith.constant 0 : index
    %124 = vector.load %arg5[%c8_45, %c0_46] : memref<40x384xf32, #tpu.memory_space<vmem>>, vector<32x256xf32>
    tpu.vector_store %arg5[%c8_45, %c0_46], %123 {strides = array<i32>} : memref<40x384xf32, #tpu.memory_space<vmem>>, vector<32x256xf32>,
    %125 = vector.extract_strided_slice %122 {offsets = [0, 0], sizes = [8, 256], strides = [1, 1]} : vector<40x256xf32> to vector<8x256xf32>
    %c8_47 = arith.constant 8 : index
    %c1_48 = arith.constant 1 : index
    %126 = vector.load %arg5[%c8_47, %c1_48] : memref<40x384xf32, #tpu.memory_space<vmem>>, vector<8x256xf32>
    %127 = arith.addf %125, %126 : vector<8x256xf32>
    %c16_49 = arith.constant 16 : index
    %c2_50 = arith.constant 2 : index
    %128 = vector.load %arg5[%c16_49, %c2_50] : memref<40x384xf32, #tpu.memory_space<vmem>>, vector<8x256xf32>
    %129 = arith.addf %127, %128 : vector<8x256xf32>
    %c24_51 = arith.constant 24 : index
    %c3_52 = arith.constant 3 : index
    %130 = vector.load %arg5[%c24_51, %c3_52] : memref<40x384xf32, #tpu.memory_space<vmem>>, vector<8x256xf32>
    %131 = arith.addf %129, %130 : vector<8x256xf32>
    %c32_53 = arith.constant 32 : index
    %c4_54 = arith.constant 4 : index
    %132 = vector.load %arg5[%c32_53, %c4_54] : memref<40x384xf32, #tpu.memory_space<vmem>>, vector<8x256xf32>
    %133 = arith.addf %131, %132 : vector<8x256xf32>
    %c16_i32 = arith.constant 16 : i32
    %134 = vector.broadcast %c16_i32 : i32 to vector<1x256xi32>
    %135 = arith.cmpi slt, %4, %134 : vector<1x256xi32>
    %cst_55 = arith.constant 0.000000e+00 : f32
    %136 = vector.shape_cast %135 : vector<1x256xi1> to vector<1x256xi1>
    %137 = vector.broadcast %136 : vector<1x256xi1> to vector<8x256xi1>
    %138 = vector.broadcast %cst_55 : f32 to vector<8x256xf32>
    %139 = arith.select %137, %133, %138 : vector<8x256xi1>, vector<8x256xf32>
    %cst_56 = arith.constant dense<0.000000e+00> : vector<8xf32>
    %140 = vector.multi_reduction <add>, %139, %cst_56 [1] : vector<8x256xf32> to vector<8xf32>
    %141 = vector.shape_cast %140 : vector<8xf32> to vector<8x1xf32>
    %cst_57 = arith.constant 3.125000e-02 : f32
    %142 = vector.broadcast %cst_57 : f32 to vector<8x1xf32>
    %143 = arith.mulf %141, %142 : vector<8x1xf32>
    %144 = vector.broadcast %143 : vector<8x1xf32> to vector<8x256xf32>
    %145 = arith.subf %133, %144 : vector<8x256xf32>
    %cst_58 = arith.constant 0.000000e+00 : f32
    %146 = vector.shape_cast %135 : vector<1x256xi1> to vector<1x256xi1>
    %147 = vector.broadcast %146 : vector<1x256xi1> to vector<8x256xi1>
    %148 = vector.broadcast %cst_58 : f32 to vector<8x256xf32>
    %149 = arith.select %147, %145, %148 : vector<8x256xi1>, vector<8x256xf32>
    %150 = arith.mulf %149, %149 : vector<8x256xf32>
    %cst_59 = arith.constant dense<0.000000e+00> : vector<8xf32>
    %151 = vector.multi_reduction <add>, %150, %cst_59 [1] : vector<8x256xf32> to vector<8xf32>
    %152 = vector.shape_cast %151 : vector<8xf32> to vector<8x1xf32>
    %cst_60 = arith.constant 3.125000e-02 : f32
    %153 = vector.broadcast %cst_60 : f32 to vector<8x1xf32>
    %154 = arith.mulf %152, %153 : vector<8x1xf32>
    %cst_61 = arith.constant 9.99999974E-6 : f32
    %155 = vector.broadcast %cst_61 : f32 to vector<8x1xf32>
    %156 = arith.addf %154, %155 : vector<8x1xf32>
    %157 = math.rsqrt %156 : vector<8x1xf32>
    %158 = vector.extract_strided_slice %5 {offsets = [0, 4], sizes = [8, 1], strides = [1, 1]} : vector<8x8xf32> to vector<8x1xf32>
    %159 = arith.mulf %157, %158 : vector<8x1xf32>
    %160 = vector.extract_strided_slice %5 {offsets = [0, 5], sizes = [8, 1], strides = [1, 1]} : vector<8x8xf32> to vector<8x1xf32>
    %161 = vector.broadcast %159 : vector<8x1xf32> to vector<8x256xf32>
    %162 = arith.mulf %149, %161 : vector<8x256xf32>
    %163 = vector.broadcast %160 : vector<8x1xf32> to vector<8x256xf32>
    %164 = arith.addf %162, %163 : vector<8x256xf32>
    %cst_62 = arith.constant 0.000000e+00 : f32
    %165 = vector.shape_cast %135 : vector<1x256xi1> to vector<1x256xi1>
    %166 = vector.broadcast %165 : vector<1x256xi1> to vector<8x256xi1>
    %167 = vector.broadcast %cst_62 : f32 to vector<8x256xf32>
    %168 = arith.select %166, %164, %167 : vector<8x256xi1>, vector<8x256xf32>
    %169 = arith.truncf %168 : vector<8x256xf32> to vector<8x256xbf16>
    %cst_63 = arith.constant dense<0.000000e+00> : vector<8x512xf32>
    %170 = tpu.matmul %169, %6, %cst_63 {dimension_numbers = #tpu.dot_dimension_numbers<[1], [0], [0], [1], [0, 0, 1, 1], [], []>} : vector<8x256xbf16>, vector<256x512xbf16>, vector<8x512xf32> -> vector<8x512xf32>
    %171 = vector.extract_strided_slice %170 {offsets = [0, 0], sizes = [8, 256], strides = [1, 1]} : vector<8x512xf32> to vector<8x256xf32>
    %172 = vector.extract_strided_slice %170 {offsets = [0, 256], sizes = [8, 256], strides = [1, 1]} : vector<8x512xf32> to vector<8x256xf32>
    %173 = arith.maximumf %171, %172 : vector<8x256xf32>
    %cst_64 = arith.constant 0.000000e+00 : f32
    %174 = vector.broadcast %cst_64 : f32 to vector<8x256xf32>
    %175 = arith.maximumf %173, %174 : vector<8x256xf32>
    %176 = arith.truncf %175 : vector<8x256xf32> to vector<8x256xbf16>
    %c120 = arith.constant 120 : index
    %c0_65 = arith.constant 0 : index
    %177 = vector.load %arg1[%c120, %c0_65] : memref<160x8xbf16, #tpu.memory_space<vmem>>, vector<40x8xbf16>
    %cst_66 = arith.constant dense<0.000000e+00> : vector<40x256xf32>
    %178 = tpu.matmul %177, %176, %cst_66 {dimension_numbers = #tpu.dot_dimension_numbers<[1], [0], [0], [1], [0, 0, 1, 1], [], []>} : vector<40x8xbf16>, vector<8x256xbf16>, vector<40x256xf32> -> vector<40x256xf32>
    %179 = vector.extract_strided_slice %178 {offsets = [8, 0], sizes = [32, 256], strides = [1, 1]} : vector<40x256xf32> to vector<32x256xf32>
    %c8_67 = arith.constant 8 : index
    %c0_68 = arith.constant 0 : index
    %180 = vector.load %arg5[%c8_67, %c0_68] : memref<40x384xf32, #tpu.memory_space<vmem>>, vector<32x256xf32>
    tpu.vector_store %arg5[%c8_67, %c0_68], %179 {strides = array<i32>} : memref<40x384xf32, #tpu.memory_space<vmem>>, vector<32x256xf32>,
    %181 = vector.extract_strided_slice %178 {offsets = [0, 0], sizes = [8, 256], strides = [1, 1]} : vector<40x256xf32> to vector<8x256xf32>
    %c8_69 = arith.constant 8 : index
    %c1_70 = arith.constant 1 : index
    %182 = vector.load %arg5[%c8_69, %c1_70] : memref<40x384xf32, #tpu.memory_space<vmem>>, vector<8x256xf32>
    %183 = arith.addf %181, %182 : vector<8x256xf32>
    %c16_71 = arith.constant 16 : index
    %c2_72 = arith.constant 2 : index
    %184 = vector.load %arg5[%c16_71, %c2_72] : memref<40x384xf32, #tpu.memory_space<vmem>>, vector<8x256xf32>
    %185 = arith.addf %183, %184 : vector<8x256xf32>
    %c24_73 = arith.constant 24 : index
    %c3_74 = arith.constant 3 : index
    %186 = vector.load %arg5[%c24_73, %c3_74] : memref<40x384xf32, #tpu.memory_space<vmem>>, vector<8x256xf32>
    %187 = arith.addf %185, %186 : vector<8x256xf32>
    %c32_75 = arith.constant 32 : index
    %c4_76 = arith.constant 4 : index
    %188 = vector.load %arg5[%c32_75, %c4_76] : memref<40x384xf32, #tpu.memory_space<vmem>>, vector<8x256xf32>
    %189 = arith.addf %187, %188 : vector<8x256xf32>
    %c8_i32 = arith.constant 8 : i32
    %190 = vector.broadcast %c8_i32 : i32 to vector<1x256xi32>
    %191 = arith.cmpi slt, %4, %190 : vector<1x256xi32>
    %cst_77 = arith.constant 0.000000e+00 : f32
    %192 = vector.shape_cast %191 : vector<1x256xi1> to vector<1x256xi1>
    %193 = vector.broadcast %192 : vector<1x256xi1> to vector<8x256xi1>
    %194 = vector.broadcast %cst_77 : f32 to vector<8x256xf32>
    %195 = arith.select %193, %189, %194 : vector<8x256xi1>, vector<8x256xf32>
    %cst_78 = arith.constant dense<0.000000e+00> : vector<8xf32>
    %196 = vector.multi_reduction <add>, %195, %cst_78 [1] : vector<8x256xf32> to vector<8xf32>
    %197 = vector.shape_cast %196 : vector<8xf32> to vector<8x1xf32>
    %cst_79 = arith.constant 6.250000e-02 : f32
    %198 = vector.broadcast %cst_79 : f32 to vector<8x1xf32>
    %199 = arith.mulf %197, %198 : vector<8x1xf32>
    %200 = vector.broadcast %199 : vector<8x1xf32> to vector<8x256xf32>
    %201 = arith.subf %189, %200 : vector<8x256xf32>
    %cst_80 = arith.constant 0.000000e+00 : f32
    %202 = vector.shape_cast %191 : vector<1x256xi1> to vector<1x256xi1>
    %203 = vector.broadcast %202 : vector<1x256xi1> to vector<8x256xi1>
    %204 = vector.broadcast %cst_80 : f32 to vector<8x256xf32>
    %205 = arith.select %203, %201, %204 : vector<8x256xi1>, vector<8x256xf32>
    %206 = arith.mulf %205, %205 : vector<8x256xf32>
    %cst_81 = arith.constant dense<0.000000e+00> : vector<8xf32>
    %207 = vector.multi_reduction <add>, %206, %cst_81 [1] : vector<8x256xf32> to vector<8xf32>
    %208 = vector.shape_cast %207 : vector<8xf32> to vector<8x1xf32>
    %cst_82 = arith.constant 6.250000e-02 : f32
    %209 = vector.broadcast %cst_82 : f32 to vector<8x1xf32>
    %210 = arith.mulf %208, %209 : vector<8x1xf32>
    %cst_83 = arith.constant 9.99999974E-6 : f32
    %211 = vector.broadcast %cst_83 : f32 to vector<8x1xf32>
    %212 = arith.addf %210, %211 : vector<8x1xf32>
    %213 = math.rsqrt %212 : vector<8x1xf32>
    %214 = vector.extract_strided_slice %5 {offsets = [0, 6], sizes = [8, 1], strides = [1, 1]} : vector<8x8xf32> to vector<8x1xf32>
    %215 = arith.mulf %213, %214 : vector<8x1xf32>
    %216 = vector.extract_strided_slice %5 {offsets = [0, 7], sizes = [8, 1], strides = [1, 1]} : vector<8x8xf32> to vector<8x1xf32>
    %217 = vector.broadcast %215 : vector<8x1xf32> to vector<8x256xf32>
    %218 = arith.mulf %205, %217 : vector<8x256xf32>
    %219 = vector.broadcast %216 : vector<8x1xf32> to vector<8x256xf32>
    %220 = arith.addf %218, %219 : vector<8x256xf32>
    %cst_84 = arith.constant 0.000000e+00 : f32
    %221 = vector.shape_cast %191 : vector<1x256xi1> to vector<1x256xi1>
    %222 = vector.broadcast %221 : vector<1x256xi1> to vector<8x256xi1>
    %223 = vector.broadcast %cst_84 : f32 to vector<8x256xf32>
    %224 = arith.select %222, %220, %223 : vector<8x256xi1>, vector<8x256xf32>
    %225 = arith.truncf %224 : vector<8x256xf32> to vector<8x256xbf16>
    %cst_85 = arith.constant dense<0.000000e+00> : vector<8x512xf32>
    %226 = tpu.matmul %225, %6, %cst_85 {dimension_numbers = #tpu.dot_dimension_numbers<[1], [0], [0], [1], [0, 0, 1, 1], [], []>} : vector<8x256xbf16>, vector<256x512xbf16>, vector<8x512xf32> -> vector<8x512xf32>
    %227 = vector.extract_strided_slice %226 {offsets = [0, 0], sizes = [8, 256], strides = [1, 1]} : vector<8x512xf32> to vector<8x256xf32>
    %228 = vector.extract_strided_slice %226 {offsets = [0, 256], sizes = [8, 256], strides = [1, 1]} : vector<8x512xf32> to vector<8x256xf32>
    %229 = arith.maximumf %227, %228 : vector<8x256xf32>
    %cst_86 = arith.constant 0.000000e+00 : f32
    %230 = vector.broadcast %cst_86 : f32 to vector<8x256xf32>
    %231 = arith.maximumf %229, %230 : vector<8x256xf32>
    %c0_87 = arith.constant 0 : index
    %c0_88 = arith.constant 0 : index
    %232 = vector.load %arg4[%c0_87, %c0_88] : memref<8x256xf32, #tpu.memory_space<vmem>>, vector<8x256xf32>
    tpu.vector_store %arg4[%c0_87, %c0_88], %231 {strides = array<i32>} : memref<8x256xf32, #tpu.memory_space<vmem>>, vector<8x256xf32>,
    return
  }
}

</mosaic_0001>

<llo_original>
// kernel: feature_extractor_cnn.1
$region0: #{feature_extractor_cnn.1}
  #allocation0 [shape = 'u32[]', space=smem, size = 0x4, offset = 0x4, fixed_abs, tag = 'smem constant byte address 0x4 - core index']
  #allocation1 [shape = 'u32[144,128]{1,0:T(1,128)}', space=vmem, size = 0x12000, scoped, tag = 'internal scratch']
  #allocation2 [shape = 'f32[40,384]{1,0:T(8,128)}', space=vmem, size = 0xf000, scoped, tag = 'scratch operand']
  %s0 = inlined_call_operand.vmem [shape: f32[8,256], index: 0, kind: input, shape index: {}]
  %s1 = inlined_call_operand.vmem [shape: bf16[160,8], index: 1, kind: input, shape index: {}]
  %s2 = inlined_call_operand.vmem [shape: f32[8,8], index: 2, kind: input, shape index: {}]
  %s3 = inlined_call_operand.vmem [shape: bf16[256,512], index: 3, kind: input, shape index: {}]
  %s4 = inlined_call_operand.vmem [shape: f32[8,256], index: 4, kind: output, shape index: {}]
  %s5 = sld [smem:[#allocation0]]
  $region26: #{feature_extractor_cnn.1} parent=0
    _
  %s7 = ssub.s32 1, %s5
  %s8 = scalar_select 0, %s7, %s5
  // Predicated region
  $region2: #{feature_extractor_cnn.1} parent=0 // pred_check
    _
  $region3: #{feature_extractor_cnn.1} parent=0 // pred_check_branch
    %10 = sbr.rel (0) target = $region5
  $region4: #{feature_extractor_cnn.1} parent=0 // pred_region
    _
  $region5: #{feature_extractor_cnn.1} parent=0 // pred_fallthru
    _
  // Predicated region
  $region6: #{feature_extractor_cnn.1} parent=0 // pred_check
    _
  $region7: #{feature_extractor_cnn.1} parent=0 // pred_check_branch
    %12 = sbr.rel (0) target = $region9
  $region8: #{feature_extractor_cnn.1} parent=0 // pred_region
    _
  $region9: #{feature_extractor_cnn.1} parent=0 // pred_fallthru
    _
  // Predicated region
  $region10: #{feature_extractor_cnn.1} parent=0 // pred_check
    _
  $region11: #{feature_extractor_cnn.1} parent=0 // pred_check_branch
    %14 = sbr.rel (0) target = $region13
  $region12: #{feature_extractor_cnn.1} parent=0 // pred_region
    _
  $region13: #{feature_extractor_cnn.1} parent=0 // pred_fallthru
    _
  // Predicated region
  $region14: #{feature_extractor_cnn.1} parent=0 // pred_check
    _
  $region15: #{feature_extractor_cnn.1} parent=0 // pred_check_branch
    %16 = sbr.rel (0) target = $region17
  $region16: #{feature_extractor_cnn.1} parent=0 // pred_region
    _
  $region17: #{feature_extractor_cnn.1} parent=0 // pred_fallthru
    _
  %18 = vst [vmem:[#allocation2 + $0x10] sm:$0xff] 0.0
  %19 = vst [vmem:[#allocation2 + $0x28] sm:$0xff] 0.0
  %20 = vst [vmem:[#allocation2 + $0x40] sm:$0xff] 0.0
  %21 = vst [vmem:[#allocation2 + $0x58] sm:$0xff] 0.0
  %22 = vst [vmem:[#allocation2 + $0x70] sm:$0xff] 0.0
  %v23 = vlaneseq
  %v24 = vand.u32 %v23, 127
  %v25 = vadd.s32 %v24, 128
  %v26 = vand.u32 %v24, 127
  %v27 = vand.u32 %v25, 127
  %v28 = vld [vmem:[%s2] sm:$0xff]
  %v29 = vld [vmem:[%s3] sm:$0xff]
  %v30 = vld [vmem:[%s3 + $0x8] sm:$0xff]
  %v31 = vld [vmem:[%s3 + $0x10] sm:$0xff]
  %v32 = vld [vmem:[%s3 + $0x18] sm:$0xff]
  %v33 = vld [vmem:[%s3 + $0x20] sm:$0xff]
  %v34 = vld [vmem:[%s3 + $0x28] sm:$0xff]
  %v35 = vld [vmem:[%s3 + $0x30] sm:$0xff]
  %v36 = vld [vmem:[%s3 + $0x38] sm:$0xff]
  %v37 = vld [vmem:[%s3 + $0x40] sm:$0xff]
  %v38 = vld [vmem:[%s3 + $0x48] sm:$0xff]
  %v39 = vld [vmem:[%s3 + $0x50] sm:$0xff]
  %v40 = vld [vmem:[%s3 + $0x58] sm:$0xff]
  %v41 = vld [vmem:[%s3 + $0x60] sm:$0xff]
  %v42 = vld [vmem:[%s3 + $0x68] sm:$0xff]
  %v43 = vld [vmem:[%s3 + $0x70] sm:$0xff]
  %v44 = vld [vmem:[%s3 + $0x78] sm:$0xff]
  %v45 = vld [vmem:[%s3 + $0x80] sm:$0xff]
  %v46 = vld [vmem:[%s3 + $0x88] sm:$0xff]
  %v47 = vld [vmem:[%s3 + $0x90] sm:$0xff]
  %v48 = vld [vmem:[%s3 + $0x98] sm:$0xff]
  %v49 = vld [vmem:[%s3 + $0xa0] sm:$0xff]
  %v50 = vld [vmem:[%s3 + $0xa8] sm:$0xff]
  %v51 = vld [vmem:[%s3 + $0xb0] sm:$0xff]
  %v52 = vld [vmem:[%s3 + $0xb8] sm:$0xff]
  %v53 = vld [vmem:[%s3 + $0xc0] sm:$0xff]
  %v54 = vld [vmem:[%s3 + $0xc8] sm:$0xff]
  %v55 = vld [vmem:[%s3 + $0xd0] sm:$0xff]
  %v56 = vld [vmem:[%s3 + $0xd8] sm:$0xff]
  %v57 = vld [vmem:[%s3 + $0xe0] sm:$0xff]
  %v58 = vld [vmem:[%s3 + $0xe8] sm:$0xff]
  %v59 = vld [vmem:[%s3 + $0xf0] sm:$0xff]
  %v60 = vld [vmem:[%s3 + $0xf8] sm:$0xff]
  %v61 = vld [vmem:[%s3 + $0x100] sm:$0xff]
  %v62 = vld [vmem:[%s3 + $0x108] sm:$0xff]
  %v63 = vld [vmem:[%s3 + $0x110] sm:$0xff]
  %v64 = vld [vmem:[%s3 + $0x118] sm:$0xff]
  %v65 = vld [vmem:[%s3 + $0x120] sm:$0xff]
  %v66 = vld [vmem:[%s3 + $0x128] sm:$0xff]
  %v67 = vld [vmem:[%s3 + $0x130] sm:$0xff]
  %v68 = vld [vmem:[%s3 + $0x138] sm:$0xff]
  %v69 = vld [vmem:[%s3 + $0x140] sm:$0xff]
  %v70 = vld [vmem:[%s3 + $0x148] sm:$0xff]
  %v71 = vld [vmem:[%s3 + $0x150] sm:$0xff]
  %v72 = vld [vmem:[%s3 + $0x158] sm:$0xff]
  %v73 = vld [vmem:[%s3 + $0x160] sm:$0xff]
  %v74 = vld [vmem:[%s3 + $0x168] sm:$0xff]
  %v75 = vld [vmem:[%s3 + $0x170] sm:$0xff]
  %v76 = vld [vmem:[%s3 + $0x178] sm:$0xff]
  %v77 = vld [vmem:[%s3 + $0x180] sm:$0xff]
  %v78 = vld [vmem:[%s3 + $0x188] sm:$0xff]
  %v79 = vld [vmem:[%s3 + $0x190] sm:$0xff]
  %v80 = vld [vmem:[%s3 + $0x198] sm:$0xff]
  %v81 = vld [vmem:[%s3 + $0x1a0] sm:$0xff]
  %v82 = vld [vmem:[%s3 + $0x1a8] sm:$0xff]
  %v83 = vld [vmem:[%s3 + $0x1b0] sm:$0xff]
  %v84 = vld [vmem:[%s3 + $0x1b8] sm:$0xff]
  %v85 = vld [vmem:[%s3 + $0x1c0] sm:$0xff]
  %v86 = vld [vmem:[%s3 + $0x1c8] sm:$0xff]
  %v87 = vld [vmem:[%s3 + $0x1d0] sm:$0xff]
  %v88 = vld [vmem:[%s3 + $0x1d8] sm:$0xff]
  %v89 = vld [vmem:[%s3 + $0x1e0] sm:$0xff]
  %v90 = vld [vmem:[%s3 + $0x1e8] sm:$0xff]
  %v91 = vld [vmem:[%s3 + $0x1f0] sm:$0xff]
  %v92 = vld [vmem:[%s3 + $0x1f8] sm:$0xff]
  %v93 = vld [vmem:[%s0] sm:$0xff]
  %v94 = vld [vmem:[%s0 + $0x8] sm:$0xff]
  %v95 = vpack.c.bf16 %v93, %v93
  %v96 = vpack.c.bf16 %v94, %v94
  %v97 = vld [vmem:[%s1] sm:$0xf]
  %v98 = vld [vmem:[%s1 + $0x4] sm:$0xf]
  %v99 = vld [vmem:[%s1 + $0x8] sm:$0xf]
  %v100 = vld [vmem:[%s1 + $0xc] sm:$0xf]
  %v101 = vld [vmem:[%s1 + $0x10] sm:$0xf]
  %v107 = vunpack.c.l.b16 %v97
  %v108 = vunpack.c.l.b16 %v98
  %v109 = vunpack.c.l.b16 %v99
  %v110 = vunpack.c.l.b16 %v100
  %v111 = vunpack.c.l.b16 %v101
  %v112 = vpack.c.b16 %v108, %v107
  %v113 = vpack.c.b16 %v110, %v109
  %v114 = vpack.c.b16 %v111, %v111
  %vm115 = vcmask 64512
  %v117 = vsel %vm115, %v112, 0
  %v120 = vsel %vm115, %v113, 0
  %v123 = vsel %vm115, %v114, 0
  %vm125 = vcmask 1043456
  %v127 = vsel %vm125, %v95, 0
  %v130 = vsel %vm125, %v96, 0
  %132 = vmatprep.subr.bf16.mxu0 %v130
  %133 = vmatpush1.bf16.msra.mxu0 %v127
  %134 = vmatprep.subr.bf16.mxu0 0
  %135 = vmatpush1.bf16.msra.mxu0 0
  %136 = vmatprep.subr.bf16.mxu0 0
  %137 = vmatpush1.bf16.msra.mxu0 0
  %138 = vmatprep.subr.bf16.mxu0 0
  %139 = vmatpush1.bf16.msra.mxu0 0
  %140 = vmatprep.subr.bf16.mxu0 0
  %141 = vmatpush1.bf16.msra.mxu0 0
  %142 = vmatprep.subr.bf16.mxu0 0
  %143 = vmatpush1.bf16.msra.mxu0 0
  %144 = vmatprep.subr.bf16.mxu0 0
  %145 = vmatpush1.bf16.msra.mxu0 0
  %146 = vmatprep.subr.bf16.mxu0 0
  %147 = vmatpush1.bf16.msra.mxu0 0
  %148 = vmatprep.subr.bf16.mxu0 0
  %149 = vmatpush1.bf16.msra.mxu0 0
  %150 = vmatprep.subr.bf16.mxu0 0
  %151 = vmatpush1.bf16.msra.mxu0 0
  %152 = vmatprep.subr.bf16.mxu0 0
  %153 = vmatpush1.bf16.msra.mxu0 0
  %154 = vmatprep.subr.bf16.mxu0 0
  %155 = vmatpush1.bf16.msra.mxu0 0
  %156 = vmatprep.subr.bf16.mxu0 0
  %157 = vmatpush1.bf16.msra.mxu0 0
  %158 = vmatprep.subr.bf16.mxu0 0
  %159 = vmatpush1.bf16.msra.mxu0 0
  %160 = vmatprep.subr.bf16.mxu0 0
  %161 = vmatpush1.bf16.msra.mxu0 0
  %162 = vmatprep.subr.bf16.mxu0 0
  %163 = vmatpush1.bf16.msra.mxu0 0
  %164 = vmatprep.mubr.bf16.mxu0 0
  %165 = vmatmul.mubr.bf16.gmra.mrb[0].mxu0 %v117
  %v166 = vpop.f32.mrb[0].mxu0
  %v167 = vadd.f32 0.0, %v166
  %v168 = vpop.f32.mrb[0].mxu0
  %v169 = vadd.f32 0.0, %v168
  %v170 = vpop.f32.mrb[0].mxu0
  %v171 = vadd.f32 0.0, %v170
  %v172 = vpop.f32.mrb[0].mxu0
  %v173 = vadd.f32 0.0, %v172
  %174 = vmatprep.mubr.bf16.mxu0 0
  %175 = vmatmul.mubr.bf16.gmra.mrb[0].mxu0 %v120
  %v176 = vpop.f32.mrb[0].mxu0
  %v177 = vadd.f32 0.0, %v176
  %v178 = vpop.f32.mrb[0].mxu0
  %v179 = vadd.f32 0.0, %v178
  %v180 = vpop.f32.mrb[0].mxu0
  %v181 = vadd.f32 0.0, %v180
  %v182 = vpop.f32.mrb[0].mxu0
  %v183 = vadd.f32 0.0, %v182
  %184 = vmatprep.mubr.bf16.mxu0 0
  %185 = vmatmul.mubr.bf16.gmra.mrb[0].mxu0 %v123
  %v186 = vpop.f32.mrb[0].mxu0
  %v187 = vadd.f32 0.0, %v186
  %v188 = vpop.f32.mrb[0].mxu0
  %v189 = vadd.f32 0.0, %v188
  %v190 = vpop.f32.mrb[0].mxu0
  %v191 = vpop.f32.mrb[0].mxu0
  %192 = vdwg.mxu0
  %193 = vst [vmem:[#allocation2 + $0x18] sm:$0xff] %v171
  %194 = vst [vmem:[#allocation2 + $0x20] sm:$0xff] %v173
  %195 = vst [vmem:[#allocation2 + $0x30] sm:$0xff] %v177
  %196 = vst [vmem:[#allocation2 + $0x38] sm:$0xff] %v179
  %197 = vst [vmem:[#allocation2 + $0x48] sm:$0xff] %v181
  %198 = vst [vmem:[#allocation2 + $0x50] sm:$0xff] %v183
  %199 = vst [vmem:[#allocation2 + $0x60] sm:$0xff] %v187
  %200 = vst [vmem:[#allocation2 + $0x68] sm:$0xff] %v189
  %v201 = vld [vmem:[#allocation2 + $0x18] sm:$0xff]
  %v202 = vld [vmem:[#allocation2 + $0x20] sm:$0xff]
  %v203 = vld [vmem:[#allocation2 + $0x28] sm:$0xff]
  %207 = vrot.lane.b32.xlu0 %v201, 127
  %v208 = vpop.permute.xlu0 %207
  %209 = vrot.lane.b32.xlu0 %v202, 127
  %v210 = vpop.permute.xlu0 %209
  %211 = vrot.lane.b32.xlu0 %v203, 127
  %v212 = vpop.permute.xlu0 %211
  %vm213 = vcmask 1039360
  %v214 = vsel %vm213, %v208, %v210
  %v215 = vsel %vm213, %v210, %v212
  %v218 = vadd.f32 %v167, %v214
  %v219 = vadd.f32 %v169, %v215
  %v220 = vld [vmem:[#allocation2 + $0x30] sm:$0xff]
  %v221 = vld [vmem:[#allocation2 + $0x38] sm:$0xff]
  %v222 = vld [vmem:[#allocation2 + $0x40] sm:$0xff]
  %226 = vrot.lane.b32.xlu0 %v220, 126
  %v227 = vpop.permute.xlu0 %226
  %228 = vrot.lane.b32.xlu0 %v221, 126
  %v229 = vpop.permute.xlu0 %228
  %230 = vrot.lane.b32.xlu0 %v222, 126
  %v231 = vpop.permute.xlu0 %230
  %vm232 = vcmask 1031168
  %v233 = vsel %vm232, %v227, %v229
  %v234 = vsel %vm232, %v229, %v231
  %v237 = vadd.f32 %v218, %v233
  %v238 = vadd.f32 %v219, %v234
  %v239 = vld [vmem:[#allocation2 + $0x48] sm:$0xff]
  %v240 = vld [vmem:[#allocation2 + $0x50] sm:$0xff]
  %v241 = vld [vmem:[#allocation2 + $0x58] sm:$0xff]
  %245 = vrot.lane.b32.xlu0 %v239, 125
  %v246 = vpop.permute.xlu0 %245
  %247 = vrot.lane.b32.xlu0 %v240, 125
  %v248 = vpop.permute.xlu0 %247
  %249 = vrot.lane.b32.xlu0 %v241, 125
  %v250 = vpop.permute.xlu0 %249
  %vm251 = vcmask 1022976
  %v252 = vsel %vm251, %v246, %v248
  %v253 = vsel %vm251, %v248, %v250
  %v256 = vadd.f32 %v237, %v252
  %v257 = vadd.f32 %v238, %v253
  %v258 = vld [vmem:[#allocation2 + $0x60] sm:$0xff]
  %v259 = vld [vmem:[#allocation2 + $0x68] sm:$0xff]
  %v260 = vld [vmem:[#allocation2 + $0x70] sm:$0xff]
  %264 = vrot.lane.b32.xlu0 %v258, 124
  %v265 = vpop.permute.xlu0 %264
  %266 = vrot.lane.b32.xlu0 %v259, 124
  %v267 = vpop.permute.xlu0 %266
  %268 = vrot.lane.b32.xlu0 %v260, 124
  %v269 = vpop.permute.xlu0 %268
  %vm270 = vcmask 1014784
  %v271 = vsel %vm270, %v265, %v267
  %v272 = vsel %vm270, %v267, %v269
  %v275 = vadd.f32 %v256, %v271
  %v276 = vadd.f32 %v257, %v272
  %vm277 = vcmp.lt.s32.totalorder %v26, 64
  %vm278 = vcmp.lt.s32.totalorder %v27, 64
  %v279 = vsel %vm277, 1, 0
  %v280 = vsel %vm278, 1, 0
  %vm281 = vcmp.eq.s32.totalorder %v279, 1
  %vm282 = vcmp.eq.s32.totalorder %v280, 1
  %v283 = vsel %vm281, %v275, 0.0
  %v284 = vsel %vm282, %v276, 0.0
  %v285 = vadd.f32 %v283, %v284
  %286 = vadd.xlane.f32.xlu0 %v285
  %v287 = vpop.xlane.xlu0 %286
  %v288 = vmul.f32 %v287, 0.0078125
  %v289 = vsub.f32 %v275, %v288
  %v290 = vsub.f32 %v276, %v288
  %v291 = vsel %vm281, %v289, 0.0
  %v292 = vsel %vm282, %v290, 0.0
  %v293 = vmul.f32 %v291, %v291
  %v294 = vmul.f32 %v292, %v292
  %v295 = vadd.f32 %v293, %v294
  %296 = vadd.xlane.f32.xlu0 %v295
  %v297 = vpop.xlane.xlu0 %296
  %v298 = vmul.f32 %v297, 0.0078125
  %v299 = vadd.f32 %v298, 1e-05
  %v300 = vrsqrt.pop %v299
  %v301 = vmul.f32 %v300, %v28
  %303 = vset.pattern.permute.xlu0 0
  %304 = vperm.xlu0 %303, %v301
  %v305 = vpop.permute.xlu0 %304
  %v307 = vmul.f32 %v291, %v305
  %v308 = vmul.f32 %v292, %v305
  %310 = vset.pattern.permute.xlu0 1
  %311 = vperm.xlu0 %310, %v28
  %v312 = vpop.permute.xlu0 %311
  %v314 = vadd.f32 %v307, %v312
  %v315 = vadd.f32 %v308, %v312
  %v316 = vsel %vm281, %v314, 0.0
  %v317 = vsel %vm282, %v315, 0.0
  %v318 = vpack.c.bf16 %v316, %v316
  %v319 = vpack.c.bf16 %v317, %v317
  %v384 = vunpack.c.l.b16 %v29
  %v385 = vunpack.c.h.b16 %v29
  %v386 = vunpack.c.l.b16 %v30
  %v387 = vunpack.c.h.b16 %v30
  %v388 = vunpack.c.l.b16 %v31
  %v389 = vunpack.c.h.b16 %v31
  %v390 = vunpack.c.l.b16 %v32
  %v391 = vunpack.c.h.b16 %v32
  %v392 = vunpack.c.l.b16 %v33
  %v393 = vunpack.c.h.b16 %v33
  %v394 = vunpack.c.l.b16 %v34
  %v395 = vunpack.c.h.b16 %v34
  %v396 = vunpack.c.l.b16 %v35
  %v397 = vunpack.c.h.b16 %v35
  %v398 = vunpack.c.l.b16 %v36
  %v399 = vunpack.c.h.b16 %v36
  %v400 = vunpack.c.l.b16 %v37
  %v401 = vunpack.c.h.b16 %v37
  %v402 = vunpack.c.l.b16 %v38
  %v403 = vunpack.c.h.b16 %v38
  %v404 = vunpack.c.l.b16 %v39
  %v405 = vunpack.c.h.b16 %v39
  %v406 = vunpack.c.l.b16 %v40
  %v407 = vunpack.c.h.b16 %v40
  %v408 = vunpack.c.l.b16 %v41
  %v409 = vunpack.c.h.b16 %v41
  %v410 = vunpack.c.l.b16 %v42
  %v411 = vunpack.c.h.b16 %v42
  %v412 = vunpack.c.l.b16 %v43
  %v413 = vunpack.c.h.b16 %v43
  %v414 = vunpack.c.l.b16 %v44
  %v415 = vunpack.c.h.b16 %v44
  %v416 = vunpack.c.l.b16 %v45
  %v417 = vunpack.c.h.b16 %v45
  %v418 = vunpack.c.l.b16 %v46
  %v419 = vunpack.c.h.b16 %v46
  %v420 = vunpack.c.l.b16 %v47
  %v421 = vunpack.c.h.b16 %v47
  %v422 = vunpack.c.l.b16 %v48
  %v423 = vunpack.c.h.b16 %v48
  %v424 = vunpack.c.l.b16 %v49
  %v425 = vunpack.c.h.b16 %v49
  %v426 = vunpack.c.l.b16 %v50
  %v427 = vunpack.c.h.b16 %v50
  %v428 = vunpack.c.l.b16 %v51
  %v429 = vunpack.c.h.b16 %v51
  %v430 = vunpack.c.l.b16 %v52
  %v431 = vunpack.c.h.b16 %v52
  %v432 = vunpack.c.l.b16 %v53
  %v433 = vunpack.c.h.b16 %v53
  %v434 = vunpack.c.l.b16 %v54
  %v435 = vunpack.c.h.b16 %v54
  %v436 = vunpack.c.l.b16 %v55
  %v437 = vunpack.c.h.b16 %v55
  %v438 = vunpack.c.l.b16 %v56
  %v439 = vunpack.c.h.b16 %v56
  %v440 = vunpack.c.l.b16 %v57
  %v441 = vunpack.c.h.b16 %v57
  %v442 = vunpack.c.l.b16 %v58
  %v443 = vunpack.c.h.b16 %v58
  %v444 = vunpack.c.l.b16 %v59
  %v445 = vunpack.c.h.b16 %v59
  %v446 = vunpack.c.l.b16 %v60
  %v447 = vunpack.c.h.b16 %v60
  %v448 = vunpack.c.l.b16 %v61
  %v449 = vunpack.c.h.b16 %v61
  %v450 = vunpack.c.l.b16 %v62
  %v451 = vunpack.c.h.b16 %v62
  %v452 = vunpack.c.l.b16 %v63
  %v453 = vunpack.c.h.b16 %v63
  %v454 = vunpack.c.l.b16 %v64
  %v455 = vunpack.c.h.b16 %v64
  %v456 = vunpack.c.l.b16 %v65
  %v457 = vunpack.c.h.b16 %v65
  %v458 = vunpack.c.l.b16 %v66
  %v459 = vunpack.c.h.b16 %v66
  %v460 = vunpack.c.l.b16 %v67
  %v461 = vunpack.c.h.b16 %v67
  %v462 = vunpack.c.l.b16 %v68
  %v463 = vunpack.c.h.b16 %v68
  %v464 = vunpack.c.l.b16 %v69
  %v465 = vunpack.c.h.b16 %v69
  %v466 = vunpack.c.l.b16 %v70
  %v467 = vunpack.c.h.b16 %v70
  %v468 = vunpack.c.l.b16 %v71
  %v469 = vunpack.c.h.b16 %v71
  %v470 = vunpack.c.l.b16 %v72
  %v471 = vunpack.c.h.b16 %v72
  %v472 = vunpack.c.l.b16 %v73
  %v473 = vunpack.c.h.b16 %v73
  %v474 = vunpack.c.l.b16 %v74
  %v475 = vunpack.c.h.b16 %v74
  %v476 = vunpack.c.l.b16 %v75
  %v477 = vunpack.c.h.b16 %v75
  %v478 = vunpack.c.l.b16 %v76
  %v479 = vunpack.c.h.b16 %v76
  %v480 = vunpack.c.l.b16 %v77
  %v481 = vunpack.c.h.b16 %v77
  %v482 = vunpack.c.l.b16 %v78
  %v483 = vunpack.c.h.b16 %v78
  %v484 = vunpack.c.l.b16 %v79
  %v485 = vunpack.c.h.b16 %v79
  %v486 = vunpack.c.l.b16 %v80
  %v487 = vunpack.c.h.b16 %v80
  %v488 = vunpack.c.l.b16 %v81
  %v489 = vunpack.c.h.b16 %v81
  %v490 = vunpack.c.l.b16 %v82
  %v491 = vunpack.c.h.b16 %v82
  %v492 = vunpack.c.l.b16 %v83
  %v493 = vunpack.c.h.b16 %v83
  %v494 = vunpack.c.l.b16 %v84
  %v495 = vunpack.c.h.b16 %v84
  %v496 = vunpack.c.l.b16 %v85
  %v497 = vunpack.c.h.b16 %v85
  %v498 = vunpack.c.l.b16 %v86
  %v499 = vunpack.c.h.b16 %v86
  %v500 = vunpack.c.l.b16 %v87
  %v501 = vunpack.c.h.b16 %v87
  %v502 = vunpack.c.l.b16 %v88
  %v503 = vunpack.c.h.b16 %v88
  %v504 = vunpack.c.l.b16 %v89
  %v505 = vunpack.c.h.b16 %v89
  %v506 = vunpack.c.l.b16 %v90
  %v507 = vunpack.c.h.b16 %v90
  %v508 = vunpack.c.l.b16 %v91
  %v509 = vunpack.c.h.b16 %v91
  %v510 = vunpack.c.l.b16 %v92
  %v511 = vunpack.c.h.b16 %v92
  %v512 = vpack.c.b16 %v388, %v384
  %v513 = vpack.c.b16 %v389, %v385
  %v514 = vpack.c.b16 %v390, %v386
  %v515 = vpack.c.b16 %v391, %v387
  %v516 = vpack.c.b16 %v396, %v392
  %v517 = vpack.c.b16 %v397, %v393
  %v518 = vpack.c.b16 %v398, %v394
  %v519 = vpack.c.b16 %v399, %v395
  %v520 = vpack.c.b16 %v404, %v400
  %v521 = vpack.c.b16 %v405, %v401
  %v522 = vpack.c.b16 %v406, %v402
  %v523 = vpack.c.b16 %v407, %v403
  %v524 = vpack.c.b16 %v412, %v408
  %v525 = vpack.c.b16 %v413, %v409
  %v526 = vpack.c.b16 %v414, %v410
  %v527 = vpack.c.b16 %v415, %v411
  %v528 = vpack.c.b16 %v420, %v416
  %v529 = vpack.c.b16 %v421, %v417
  %v530 = vpack.c.b16 %v422, %v418
  %v531 = vpack.c.b16 %v423, %v419
  %v532 = vpack.c.b16 %v428, %v424
  %v533 = vpack.c.b16 %v429, %v425
  %v534 = vpack.c.b16 %v430, %v426
  %v535 = vpack.c.b16 %v431, %v427
  %v536 = vpack.c.b16 %v436, %v432
  %v537 = vpack.c.b16 %v437, %v433
  %v538 = vpack.c.b16 %v438, %v434
  %v539 = vpack.c.b16 %v439, %v435
  %v540 = vpack.c.b16 %v444, %v440
  %v541 = vpack.c.b16 %v445, %v441
  %v542 = vpack.c.b16 %v446, %v442
  %v543 = vpack.c.b16 %v447, %v443
  %v544 = vpack.c.b16 %v452, %v448
  %v545 = vpack.c.b16 %v453, %v449
  %v546 = vpack.c.b16 %v454, %v450
  %v547 = vpack.c.b16 %v455, %v451
  %v548 = vpack.c.b16 %v460, %v456
  %v549 = vpack.c.b16 %v461, %v457
  %v550 = vpack.c.b16 %v462, %v458
  %v551 = vpack.c.b16 %v463, %v459
  %v552 = vpack.c.b16 %v468, %v464
  %v553 = vpack.c.b16 %v469, %v465
  %v554 = vpack.c.b16 %v470, %v466
  %v555 = vpack.c.b16 %v471, %v467
  %v556 = vpack.c.b16 %v476, %v472
  %v557 = vpack.c.b16 %v477, %v473
  %v558 = vpack.c.b16 %v478, %v474
  %v559 = vpack.c.b16 %v479, %v475
  %v560 = vpack.c.b16 %v484, %v480
  %v561 = vpack.c.b16 %v485, %v481
  %v562 = vpack.c.b16 %v486, %v482
  %v563 = vpack.c.b16 %v487, %v483
  %v564 = vpack.c.b16 %v492, %v488
  %v565 = vpack.c.b16 %v493, %v489
  %v566 = vpack.c.b16 %v494, %v490
  %v567 = vpack.c.b16 %v495, %v491
  %v568 = vpack.c.b16 %v500, %v496
  %v569 = vpack.c.b16 %v501, %v497
  %v570 = vpack.c.b16 %v502, %v498
  %v571 = vpack.c.b16 %v503, %v499
  %v572 = vpack.c.b16 %v508, %v504
  %v573 = vpack.c.b16 %v509, %v505
  %v574 = vpack.c.b16 %v510, %v506
  %v575 = vpack.c.b16 %v511, %v507
  %640 = vmatprep.subr.bf16.mxu0 %v513
  %641 = vmatpush1.bf16.msra.mxu0 %v512
  %642 = vmatprep.subr.bf16.mxu0 %v517
  %643 = vmatpush1.bf16.msra.mxu0 %v516
  %644 = vmatprep.subr.bf16.mxu0 %v521
  %645 = vmatpush1.bf16.msra.mxu0 %v520
  %646 = vmatprep.subr.bf16.mxu0 %v525
  %647 = vmatpush1.bf16.msra.mxu0 %v524
  %648 = vmatprep.subr.bf16.mxu0 %v529
  %649 = vmatpush1.bf16.msra.mxu0 %v528
  %650 = vmatprep.subr.bf16.mxu0 %v533
  %651 = vmatpush1.bf16.msra.mxu0 %v532
  %652 = vmatprep.subr.bf16.mxu0 %v537
  %653 = vmatpush1.bf16.msra.mxu0 %v536
  %654 = vmatprep.subr.bf16.mxu0 %v541
  %655 = vmatpush1.bf16.msra.mxu0 %v540
  %656 = vmatprep.subr.bf16.mxu0 %v545
  %657 = vmatpush1.bf16.msra.mxu0 %v544
  %658 = vmatprep.subr.bf16.mxu0 %v549
  %659 = vmatpush1.bf16.msra.mxu0 %v548
  %660 = vmatprep.subr.bf16.mxu0 %v553
  %661 = vmatpush1.bf16.msra.mxu0 %v552
  %662 = vmatprep.subr.bf16.mxu0 %v557
  %663 = vmatpush1.bf16.msra.mxu0 %v556
  %664 = vmatprep.subr.bf16.mxu0 %v561
  %665 = vmatpush1.bf16.msra.mxu0 %v560
  %666 = vmatprep.subr.bf16.mxu0 %v565
  %667 = vmatpush1.bf16.msra.mxu0 %v564
  %668 = vmatprep.subr.bf16.mxu0 %v569
  %669 = vmatpush1.bf16.msra.mxu0 %v568
  %670 = vmatprep.subr.bf16.mxu0 %v573
  %671 = vmatpush1.bf16.msra.mxu0 %v572
  %672 = vmatprep.mubr.bf16.mxu0 %v319
  %673 = vmatmul.mubr.bf16.gmra.mrb[0].mxu0 %v318
  %v674 = vpop.f32.mrb[0].mxu0
  %v675 = vadd.f32 0.0, %v674
  %v676 = vpop.f32.mrb[0].mxu0
  %v677 = vadd.f32 0.0, %v676
  %v678 = vpop.f32.mrb[0].mxu0
  %v679 = vpop.f32.mrb[0].mxu0
  %680 = vdwg.mxu0
  %681 = vmatprep.subr.bf16.mxu0 %v515
  %682 = vmatpush1.bf16.msra.mxu0 %v514
  %683 = vmatprep.subr.bf16.mxu0 %v519
  %684 = vmatpush1.bf16.msra.mxu0 %v518
  %685 = vmatprep.subr.bf16.mxu0 %v523
  %686 = vmatpush1.bf16.msra.mxu0 %v522
  %687 = vmatprep.subr.bf16.mxu0 %v527
  %688 = vmatpush1.bf16.msra.mxu0 %v526
  %689 = vmatprep.subr.bf16.mxu0 %v531
  %690 = vmatpush1.bf16.msra.mxu0 %v530
  %691 = vmatprep.subr.bf16.mxu0 %v535
  %692 = vmatpush1.bf16.msra.mxu0 %v534
  %693 = vmatprep.subr.bf16.mxu0 %v539
  %694 = vmatpush1.bf16.msra.mxu0 %v538
  %695 = vmatprep.subr.bf16.mxu0 %v543
  %696 = vmatpush1.bf16.msra.mxu0 %v542
  %697 = vmatprep.subr.bf16.mxu0 %v547
  %698 = vmatpush1.bf16.msra.mxu0 %v546
  %699 = vmatprep.subr.bf16.mxu0 %v551
  %700 = vmatpush1.bf16.msra.mxu0 %v550
  %701 = vmatprep.subr.bf16.mxu0 %v555
  %702 = vmatpush1.bf16.msra.mxu0 %v554
  %703 = vmatprep.subr.bf16.mxu0 %v559
  %704 = vmatpush1.bf16.msra.mxu0 %v558
  %705 = vmatprep.subr.bf16.mxu0 %v563
  %706 = vmatpush1.bf16.msra.mxu0 %v562
  %707 = vmatprep.subr.bf16.mxu0 %v567
  %708 = vmatpush1.bf16.msra.mxu0 %v566
  %709 = vmatprep.subr.bf16.mxu0 %v571
  %710 = vmatpush1.bf16.msra.mxu0 %v570
  %711 = vmatprep.subr.bf16.mxu0 %v575
  %712 = vmatpush1.bf16.msra.mxu0 %v574
  %713 = vmatprep.mubr.bf16.mxu0 %v319
  %714 = vmatmul.mubr.bf16.gmra.mrb[0].mxu0 %v318
  %v715 = vpop.f32.mrb[0].mxu0
  %v716 = vadd.f32 0.0, %v715
  %v717 = vpop.f32.mrb[0].mxu0
  %v718 = vadd.f32 0.0, %v717
  %v719 = vpop.f32.mrb[0].mxu0
  %v720 = vpop.f32.mrb[0].mxu0
  %721 = vdwg.mxu0
  %v722 = vmax.f32 %v675, %v716
  %v723 = vmax.f32 %v677, %v718
  %v724 = vmax.f32 %v722, 0.0
  %v725 = vmax.f32 %v723, 0.0
  %v726 = vpack.c.bf16 %v724, %v724
  %v727 = vpack.c.bf16 %v725, %v725
  %v728 = vld [vmem:[%s1 + $0x14] sm:$0xf]
  %v729 = vld [vmem:[%s1 + $0x18] sm:$0xf]
  %v730 = vld [vmem:[%s1 + $0x1c] sm:$0xf]
  %v731 = vld [vmem:[%s1 + $0x20] sm:$0xf]
  %v732 = vld [vmem:[%s1 + $0x24] sm:$0xf]
  %v738 = vunpack.c.l.b16 %v728
  %v739 = vunpack.c.l.b16 %v729
  %v740 = vunpack.c.l.b16 %v730
  %v741 = vunpack.c.l.b16 %v731
  %v742 = vunpack.c.l.b16 %v732
  %v743 = vpack.c.b16 %v739, %v738
  %v744 = vpack.c.b16 %v741, %v740
  %v745 = vpack.c.b16 %v742, %v742
  %v747 = vsel %vm115, %v743, 0
  %v750 = vsel %vm115, %v744, 0
  %v753 = vsel %vm115, %v745, 0
  %v756 = vsel %vm125, %v726, 0
  %v759 = vsel %vm125, %v727, 0
  %761 = vmatprep.subr.bf16.mxu0 %v759
  %762 = vmatpush1.bf16.msra.mxu0 %v756
  %763 = vmatprep.subr.bf16.mxu0 0
  %764 = vmatpush1.bf16.msra.mxu0 0
  %765 = vmatprep.subr.bf16.mxu0 0
  %766 = vmatpush1.bf16.msra.mxu0 0
  %767 = vmatprep.subr.bf16.mxu0 0
  %768 = vmatpush1.bf16.msra.mxu0 0
  %769 = vmatprep.subr.bf16.mxu0 0
  %770 = vmatpush1.bf16.msra.mxu0 0
  %771 = vmatprep.subr.bf16.mxu0 0
  %772 = vmatpush1.bf16.msra.mxu0 0
  %773 = vmatprep.subr.bf16.mxu0 0
  %774 = vmatpush1.bf16.msra.mxu0 0
  %775 = vmatprep.subr.bf16.mxu0 0
  %776 = vmatpush1.bf16.msra.mxu0 0
  %777 = vmatprep.subr.bf16.mxu0 0
  %778 = vmatpush1.bf16.msra.mxu0 0
  %779 = vmatprep.subr.bf16.mxu0 0
  %780 = vmatpush1.bf16.msra.mxu0 0
  %781 = vmatprep.subr.bf16.mxu0 0
  %782 = vmatpush1.bf16.msra.mxu0 0
  %783 = vmatprep.subr.bf16.mxu0 0
  %784 = vmatpush1.bf16.msra.mxu0 0
  %785 = vmatprep.subr.bf16.mxu0 0
  %786 = vmatpush1.bf16.msra.mxu0 0
  %787 = vmatprep.subr.bf16.mxu0 0
  %788 = vmatpush1.bf16.msra.mxu0 0
  %789 = vmatprep.subr.bf16.mxu0 0
  %790 = vmatpush1.bf16.msra.mxu0 0
  %791 = vmatprep.subr.bf16.mxu0 0
  %792 = vmatpush1.bf16.msra.mxu0 0
  %793 = vmatprep.mubr.bf16.mxu0 0
  %794 = vmatmul.mubr.bf16.gmra.mrb[0].mxu0 %v747
  %v795 = vpop.f32.mrb[0].mxu0
  %v796 = vadd.f32 0.0, %v795
  %v797 = vpop.f32.mrb[0].mxu0
  %v798 = vadd.f32 0.0, %v797
  %v799 = vpop.f32.mrb[0].mxu0
  %v800 = vadd.f32 0.0, %v799
  %v801 = vpop.f32.mrb[0].mxu0
  %v802 = vadd.f32 0.0, %v801
  %803 = vmatprep.mubr.bf16.mxu0 0
  %804 = vmatmul.mubr.bf16.gmra.mrb[0].mxu0 %v750
  %v805 = vpop.f32.mrb[0].mxu0
  %v806 = vadd.f32 0.0, %v805
  %v807 = vpop.f32.mrb[0].mxu0
  %v808 = vadd.f32 0.0, %v807
  %v809 = vpop.f32.mrb[0].mxu0
  %v810 = vadd.f32 0.0, %v809
  %v811 = vpop.f32.mrb[0].mxu0
  %v812 = vadd.f32 0.0, %v811
  %813 = vmatprep.mubr.bf16.mxu0 0
  %814 = vmatmul.mubr.bf16.gmra.mrb[0].mxu0 %v753
  %v815 = vpop.f32.mrb[0].mxu0
  %v816 = vadd.f32 0.0, %v815
  %v817 = vpop.f32.mrb[0].mxu0
  %v818 = vadd.f32 0.0, %v817
  %v819 = vpop.f32.mrb[0].mxu0
  %v820 = vpop.f32.mrb[0].mxu0
  %821 = vdwg.mxu0
  %822 = vst [vmem:[#allocation2 + $0x18] sm:$0xff] %v800
  %823 = vst [vmem:[#allocation2 + $0x20] sm:$0xff] %v802
  %824 = vst [vmem:[#allocation2 + $0x30] sm:$0xff] %v806
  %825 = vst [vmem:[#allocation2 + $0x38] sm:$0xff] %v808
  %826 = vst [vmem:[#allocation2 + $0x48] sm:$0xff] %v810
  %827 = vst [vmem:[#allocation2 + $0x50] sm:$0xff] %v812
  %828 = vst [vmem:[#allocation2 + $0x60] sm:$0xff] %v816
  %829 = vst [vmem:[#allocation2 + $0x68] sm:$0xff] %v818
  %v830 = vld [vmem:[#allocation2 + $0x18] sm:$0xff]
  %v831 = vld [vmem:[#allocation2 + $0x20] sm:$0xff]
  %v832 = vld [vmem:[#allocation2 + $0x28] sm:$0xff]
  %836 = vrot.lane.b32.xlu0 %v830, 127
  %v837 = vpop.permute.xlu0 %836
  %838 = vrot.lane.b32.xlu0 %v831, 127
  %v839 = vpop.permute.xlu0 %838
  %840 = vrot.lane.b32.xlu0 %v832, 127
  %v841 = vpop.permute.xlu0 %840
  %v842 = vsel %vm213, %v837, %v839
  %v843 = vsel %vm213, %v839, %v841
  %v846 = vadd.f32 %v796, %v842
  %v847 = vadd.f32 %v798, %v843
  %v848 = vld [vmem:[#allocation2 + $0x30] sm:$0xff]
  %v849 = vld [vmem:[#allocation2 + $0x38] sm:$0xff]
  %v850 = vld [vmem:[#allocation2 + $0x40] sm:$0xff]
  %854 = vrot.lane.b32.xlu0 %v848, 126
  %v855 = vpop.permute.xlu0 %854
  %856 = vrot.lane.b32.xlu0 %v849, 126
  %v857 = vpop.permute.xlu0 %856
  %858 = vrot.lane.b32.xlu0 %v850, 126
  %v859 = vpop.permute.xlu0 %858
  %v860 = vsel %vm232, %v855, %v857
  %v861 = vsel %vm232, %v857, %v859
  %v864 = vadd.f32 %v846, %v860
  %v865 = vadd.f32 %v847, %v861
  %v866 = vld [vmem:[#allocation2 + $0x48] sm:$0xff]
  %v867 = vld [vmem:[#allocation2 + $0x50] sm:$0xff]
  %v868 = vld [vmem:[#allocation2 + $0x58] sm:$0xff]
  %872 = vrot.lane.b32.xlu0 %v866, 125
  %v873 = vpop.permute.xlu0 %872
  %874 = vrot.lane.b32.xlu0 %v867, 125
  %v875 = vpop.permute.xlu0 %874
  %876 = vrot.lane.b32.xlu0 %v868, 125
  %v877 = vpop.permute.xlu0 %876
  %v878 = vsel %vm251, %v873, %v875
  %v879 = vsel %vm251, %v875, %v877
  %v882 = vadd.f32 %v864, %v878
  %v883 = vadd.f32 %v865, %v879
  %v884 = vld [vmem:[#allocation2 + $0x60] sm:$0xff]
  %v885 = vld [vmem:[#allocation2 + $0x68] sm:$0xff]
  %v886 = vld [vmem:[#allocation2 + $0x70] sm:$0xff]
  %890 = vrot.lane.b32.xlu0 %v884, 124
  %v891 = vpop.permute.xlu0 %890
  %892 = vrot.lane.b32.xlu0 %v885, 124
  %v893 = vpop.permute.xlu0 %892
  %894 = vrot.lane.b32.xlu0 %v886, 124
  %v895 = vpop.permute.xlu0 %894
  %v896 = vsel %vm270, %v891, %v893
  %v897 = vsel %vm270, %v893, %v895
  %v900 = vadd.f32 %v882, %v896
  %v901 = vadd.f32 %v883, %v897
  %vm902 = vcmp.lt.s32.totalorder %v26, 32
  %vm903 = vcmp.lt.s32.totalorder %v27, 32
  %v904 = vsel %vm902, 1, 0
  %v905 = vsel %vm903, 1, 0
  %vm906 = vcmp.eq.s32.totalorder %v904, 1
  %vm907 = vcmp.eq.s32.totalorder %v905, 1
  %v908 = vsel %vm906, %v900, 0.0
  %v909 = vsel %vm907, %v901, 0.0
  %v910 = vadd.f32 %v908, %v909
  %911 = vadd.xlane.f32.xlu0 %v910
  %v912 = vpop.xlane.xlu0 %911
  %v913 = vmul.f32 %v912, 0.015625
  %v914 = vsub.f32 %v900, %v913
  %v915 = vsub.f32 %v901, %v913
  %v916 = vsel %vm906, %v914, 0.0
  %v917 = vsel %vm907, %v915, 0.0
  %v918 = vmul.f32 %v916, %v916
  %v919 = vmul.f32 %v917, %v917
  %v920 = vadd.f32 %v918, %v919
  %921 = vadd.xlane.f32.xlu0 %v920
  %v922 = vpop.xlane.xlu0 %921
  %v923 = vmul.f32 %v922, 0.015625
  %v924 = vadd.f32 %v923, 1e-05
  %v925 = vrsqrt.pop %v924
  %v926 = vmul.f32 %v925, %v28
  %928 = vset.pattern.permute.xlu0 2
  %929 = vperm.xlu0 %928, %v926
  %v930 = vpop.permute.xlu0 %929
  %v932 = vmul.f32 %v916, %v930
  %v933 = vmul.f32 %v917, %v930
  %934 = vset.pattern.permute.xlu0 3
  %935 = vperm.xlu0 %934, %v28
  %v936 = vpop.permute.xlu0 %935
  %v938 = vadd.f32 %v932, %v936
  %v939 = vadd.f32 %v933, %v936
  %v940 = vsel %vm906, %v938, 0.0
  %v941 = vsel %vm907, %v939, 0.0
  %v942 = vpack.c.bf16 %v940, %v940
  %v943 = vpack.c.bf16 %v941, %v941
  %944 = vmatprep.subr.bf16.mxu0 %v513
  %945 = vmatpush1.bf16.msra.mxu0 %v512
  %946 = vmatprep.subr.bf16.mxu0 %v517
  %947 = vmatpush1.bf16.msra.mxu0 %v516
  %948 = vmatprep.subr.bf16.mxu0 %v521
  %949 = vmatpush1.bf16.msra.mxu0 %v520
  %950 = vmatprep.subr.bf16.mxu0 %v525
  %951 = vmatpush1.bf16.msra.mxu0 %v524
  %952 = vmatprep.subr.bf16.mxu0 %v529
  %953 = vmatpush1.bf16.msra.mxu0 %v528
  %954 = vmatprep.subr.bf16.mxu0 %v533
  %955 = vmatpush1.bf16.msra.mxu0 %v532
  %956 = vmatprep.subr.bf16.mxu0 %v537
  %957 = vmatpush1.bf16.msra.mxu0 %v536
  %958 = vmatprep.subr.bf16.mxu0 %v541
  %959 = vmatpush1.bf16.msra.mxu0 %v540
  %960 = vmatprep.subr.bf16.mxu0 %v545
  %961 = vmatpush1.bf16.msra.mxu0 %v544
  %962 = vmatprep.subr.bf16.mxu0 %v549
  %963 = vmatpush1.bf16.msra.mxu0 %v548
  %964 = vmatprep.subr.bf16.mxu0 %v553
  %965 = vmatpush1.bf16.msra.mxu0 %v552
  %966 = vmatprep.subr.bf16.mxu0 %v557
  %967 = vmatpush1.bf16.msra.mxu0 %v556
  %968 = vmatprep.subr.bf16.mxu0 %v561
  %969 = vmatpush1.bf16.msra.mxu0 %v560
  %970 = vmatprep.subr.bf16.mxu0 %v565
  %971 = vmatpush1.bf16.msra.mxu0 %v564
  %972 = vmatprep.subr.bf16.mxu0 %v569
  %973 = vmatpush1.bf16.msra.mxu0 %v568
  %974 = vmatprep.subr.bf16.mxu0 %v573
  %975 = vmatpush1.bf16.msra.mxu0 %v572
  %976 = vmatprep.mubr.bf16.mxu0 %v943
  %977 = vmatmul.mubr.bf16.gmra.mrb[0].mxu0 %v942
  %v978 = vpop.f32.mrb[0].mxu0
  %v979 = vadd.f32 0.0, %v978
  %v980 = vpop.f32.mrb[0].mxu0
  %v981 = vadd.f32 0.0, %v980
  %v982 = vpop.f32.mrb[0].mxu0
  %v983 = vpop.f32.mrb[0].mxu0
  %984 = vdwg.mxu0
  %985 = vmatprep.subr.bf16.mxu0 %v515
  %986 = vmatpush1.bf16.msra.mxu0 %v514
  %987 = vmatprep.subr.bf16.mxu0 %v519
  %988 = vmatpush1.bf16.msra.mxu0 %v518
  %989 = vmatprep.subr.bf16.mxu0 %v523
  %990 = vmatpush1.bf16.msra.mxu0 %v522
  %991 = vmatprep.subr.bf16.mxu0 %v527
  %992 = vmatpush1.bf16.msra.mxu0 %v526
  %993 = vmatprep.subr.bf16.mxu0 %v531
  %994 = vmatpush1.bf16.msra.mxu0 %v530
  %995 = vmatprep.subr.bf16.mxu0 %v535
  %996 = vmatpush1.bf16.msra.mxu0 %v534
  %997 = vmatprep.subr.bf16.mxu0 %v539
  %998 = vmatpush1.bf16.msra.mxu0 %v538
  %999 = vmatprep.subr.bf16.mxu0 %v543
  %1000 = vmatpush1.bf16.msra.mxu0 %v542
  %1001 = vmatprep.subr.bf16.mxu0 %v547
  %1002 = vmatpush1.bf16.msra.mxu0 %v546
  %1003 = vmatprep.subr.bf16.mxu0 %v551
  %1004 = vmatpush1.bf16.msra.mxu0 %v550
  %1005 = vmatprep.subr.bf16.mxu0 %v555
  %1006 = vmatpush1.bf16.msra.mxu0 %v554
  %1007 = vmatprep.subr.bf16.mxu0 %v559
  %1008 = vmatpush1.bf16.msra.mxu0 %v558
  %1009 = vmatprep.subr.bf16.mxu0 %v563
  %1010 = vmatpush1.bf16.msra.mxu0 %v562
  %1011 = vmatprep.subr.bf16.mxu0 %v567
  %1012 = vmatpush1.bf16.msra.mxu0 %v566
  %1013 = vmatprep.subr.bf16.mxu0 %v571
  %1014 = vmatpush1.bf16.msra.mxu0 %v570
  %1015 = vmatprep.subr.bf16.mxu0 %v575
  %1016 = vmatpush1.bf16.msra.mxu0 %v574
  %1017 = vmatprep.mubr.bf16.mxu0 %v943
  %1018 = vmatmul.mubr.bf16.gmra.mrb[0].mxu0 %v942
  %v1019 = vpop.f32.mrb[0].mxu0
  %v1020 = vadd.f32 0.0, %v1019
  %v1021 = vpop.f32.mrb[0].mxu0
  %v1022 = vadd.f32 0.0, %v1021
  %v1023 = vpop.f32.mrb[0].mxu0
  %v1024 = vpop.f32.mrb[0].mxu0
  %1025 = vdwg.mxu0
  %v1026 = vmax.f32 %v979, %v1020
  %v1027 = vmax.f32 %v981, %v1022
  %v1028 = vmax.f32 %v1026, 0.0
  %v1029 = vmax.f32 %v1027, 0.0
  %v1030 = vpack.c.bf16 %v1028, %v1028
  %v1031 = vpack.c.bf16 %v1029, %v1029
  %v1032 = vld [vmem:[%s1 + $0x28] sm:$0xf]
  %v1033 = vld [vmem:[%s1 + $0x2c] sm:$0xf]
  %v1034 = vld [vmem:[%s1 + $0x30] sm:$0xf]
  %v1035 = vld [vmem:[%s1 + $0x34] sm:$0xf]
  %v1036 = vld [vmem:[%s1 + $0x38] sm:$0xf]
  %v1042 = vunpack.c.l.b16 %v1032
  %v1043 = vunpack.c.l.b16 %v1033
  %v1044 = vunpack.c.l.b16 %v1034
  %v1045 = vunpack.c.l.b16 %v1035
  %v1046 = vunpack.c.l.b16 %v1036
  %v1047 = vpack.c.b16 %v1043, %v1042
  %v1048 = vpack.c.b16 %v1045, %v1044
  %v1049 = vpack.c.b16 %v1046, %v1046
  %v1051 = vsel %vm115, %v1047, 0
  %v1054 = vsel %vm115, %v1048, 0
  %v1057 = vsel %vm115, %v1049, 0
  %v1060 = vsel %vm125, %v1030, 0
  %v1063 = vsel %vm125, %v1031, 0
  %1065 = vmatprep.subr.bf16.mxu0 %v1063
  %1066 = vmatpush1.bf16.msra.mxu0 %v1060
  %1067 = vmatprep.subr.bf16.mxu0 0
  %1068 = vmatpush1.bf16.msra.mxu0 0
  %1069 = vmatprep.subr.bf16.mxu0 0
  %1070 = vmatpush1.bf16.msra.mxu0 0
  %1071 = vmatprep.subr.bf16.mxu0 0
  %1072 = vmatpush1.bf16.msra.mxu0 0
  %1073 = vmatprep.subr.bf16.mxu0 0
  %1074 = vmatpush1.bf16.msra.mxu0 0
  %1075 = vmatprep.subr.bf16.mxu0 0
  %1076 = vmatpush1.bf16.msra.mxu0 0
  %1077 = vmatprep.subr.bf16.mxu0 0
  %1078 = vmatpush1.bf16.msra.mxu0 0
  %1079 = vmatprep.subr.bf16.mxu0 0
  %1080 = vmatpush1.bf16.msra.mxu0 0
  %1081 = vmatprep.subr.bf16.mxu0 0
  %1082 = vmatpush1.bf16.msra.mxu0 0
  %1083 = vmatprep.subr.bf16.mxu0 0
  %1084 = vmatpush1.bf16.msra.mxu0 0
  %1085 = vmatprep.subr.bf16.mxu0 0
  %1086 = vmatpush1.bf16.msra.mxu0 0
  %1087 = vmatprep.subr.bf16.mxu0 0
  %1088 = vmatpush1.bf16.msra.mxu0 0
  %1089 = vmatprep.subr.bf16.mxu0 0
  %1090 = vmatpush1.bf16.msra.mxu0 0
  %1091 = vmatprep.subr.bf16.mxu0 0
  %1092 = vmatpush1.bf16.msra.mxu0 0
  %1093 = vmatprep.subr.bf16.mxu0 0
  %1094 = vmatpush1.bf16.msra.mxu0 0
  %1095 = vmatprep.subr.bf16.mxu0 0
  %1096 = vmatpush1.bf16.msra.mxu0 0
  %1097 = vmatprep.mubr.bf16.mxu0 0
  %1098 = vmatmul.mubr.bf16.gmra.mrb[0].mxu0 %v1051
  %v1099 = vpop.f32.mrb[0].mxu0
  %v1100 = vadd.f32 0.0, %v1099
  %v1101 = vpop.f32.mrb[0].mxu0
  %v1102 = vadd.f32 0.0, %v1101
  %v1103 = vpop.f32.mrb[0].mxu0
  %v1104 = vadd.f32 0.0, %v1103
  %v1105 = vpop.f32.mrb[0].mxu0
  %v1106 = vadd.f32 0.0, %v1105
  %1107 = vmatprep.mubr.bf16.mxu0 0
  %1108 = vmatmul.mubr.bf16.gmra.mrb[0].mxu0 %v1054
  %v1109 = vpop.f32.mrb[0].mxu0
  %v1110 = vadd.f32 0.0, %v1109
  %v1111 = vpop.f32.mrb[0].mxu0
  %v1112 = vadd.f32 0.0, %v1111
  %v1113 = vpop.f32.mrb[0].mxu0
  %v1114 = vadd.f32 0.0, %v1113
  %v1115 = vpop.f32.mrb[0].mxu0
  %v1116 = vadd.f32 0.0, %v1115
  %1117 = vmatprep.mubr.bf16.mxu0 0
  %1118 = vmatmul.mubr.bf16.gmra.mrb[0].mxu0 %v1057
  %v1119 = vpop.f32.mrb[0].mxu0
  %v1120 = vadd.f32 0.0, %v1119
  %v1121 = vpop.f32.mrb[0].mxu0
  %v1122 = vadd.f32 0.0, %v1121
  %v1123 = vpop.f32.mrb[0].mxu0
  %v1124 = vpop.f32.mrb[0].mxu0
  %1125 = vdwg.mxu0
  %1126 = vst [vmem:[#allocation2 + $0x18] sm:$0xff] %v1104
  %1127 = vst [vmem:[#allocation2 + $0x20] sm:$0xff] %v1106
  %1128 = vst [vmem:[#allocation2 + $0x30] sm:$0xff] %v1110
  %1129 = vst [vmem:[#allocation2 + $0x38] sm:$0xff] %v1112
  %1130 = vst [vmem:[#allocation2 + $0x48] sm:$0xff] %v1114
  %1131 = vst [vmem:[#allocation2 + $0x50] sm:$0xff] %v1116
  %1132 = vst [vmem:[#allocation2 + $0x60] sm:$0xff] %v1120
  %1133 = vst [vmem:[#allocation2 + $0x68] sm:$0xff] %v1122
  %v1134 = vld [vmem:[#allocation2 + $0x18] sm:$0xff]
  %v1135 = vld [vmem:[#allocation2 + $0x20] sm:$0xff]
  %v1136 = vld [vmem:[#allocation2 + $0x28] sm:$0xff]
  %1140 = vrot.lane.b32.xlu0 %v1134, 127
  %v1141 = vpop.permute.xlu0 %1140
  %1142 = vrot.lane.b32.xlu0 %v1135, 127
  %v1143 = vpop.permute.xlu0 %1142
  %1144 = vrot.lane.b32.xlu0 %v1136, 127
  %v1145 = vpop.permute.xlu0 %1144
  %v1146 = vsel %vm213, %v1141, %v1143
  %v1147 = vsel %vm213, %v1143, %v1145
  %v1150 = vadd.f32 %v1100, %v1146
  %v1151 = vadd.f32 %v1102, %v1147
  %v1152 = vld [vmem:[#allocation2 + $0x30] sm:$0xff]
  %v1153 = vld [vmem:[#allocation2 + $0x38] sm:$0xff]
  %v1154 = vld [vmem:[#allocation2 + $0x40] sm:$0xff]
  %1158 = vrot.lane.b32.xlu0 %v1152, 126
  %v1159 = vpop.permute.xlu0 %1158
  %1160 = vrot.lane.b32.xlu0 %v1153, 126
  %v1161 = vpop.permute.xlu0 %1160
  %1162 = vrot.lane.b32.xlu0 %v1154, 126
  %v1163 = vpop.permute.xlu0 %1162
  %v1164 = vsel %vm232, %v1159, %v1161
  %v1165 = vsel %vm232, %v1161, %v1163
  %v1168 = vadd.f32 %v1150, %v1164
  %v1169 = vadd.f32 %v1151, %v1165
  %v1170 = vld [vmem:[#allocation2 + $0x48] sm:$0xff]
  %v1171 = vld [vmem:[#allocation2 + $0x50] sm:$0xff]
  %v1172 = vld [vmem:[#allocation2 + $0x58] sm:$0xff]
  %1176 = vrot.lane.b32.xlu0 %v1170, 125
  %v1177 = vpop.permute.xlu0 %1176
  %1178 = vrot.lane.b32.xlu0 %v1171, 125
  %v1179 = vpop.permute.xlu0 %1178
  %1180 = vrot.lane.b32.xlu0 %v1172, 125
  %v1181 = vpop.permute.xlu0 %1180
  %v1182 = vsel %vm251, %v1177, %v1179
  %v1183 = vsel %vm251, %v1179, %v1181
  %v1186 = vadd.f32 %v1168, %v1182
  %v1187 = vadd.f32 %v1169, %v1183
  %v1188 = vld [vmem:[#allocation2 + $0x60] sm:$0xff]
  %v1189 = vld [vmem:[#allocation2 + $0x68] sm:$0xff]
  %v1190 = vld [vmem:[#allocation2 + $0x70] sm:$0xff]
  %1194 = vrot.lane.b32.xlu0 %v1188, 124
  %v1195 = vpop.permute.xlu0 %1194
  %1196 = vrot.lane.b32.xlu0 %v1189, 124
  %v1197 = vpop.permute.xlu0 %1196
  %1198 = vrot.lane.b32.xlu0 %v1190, 124
  %v1199 = vpop.permute.xlu0 %1198
  %v1200 = vsel %vm270, %v1195, %v1197
  %v1201 = vsel %vm270, %v1197, %v1199
  %v1204 = vadd.f32 %v1186, %v1200
  %v1205 = vadd.f32 %v1187, %v1201
  %vm1206 = vcmp.lt.s32.totalorder %v26, 16
  %vm1207 = vcmp.lt.s32.totalorder %v27, 16
  %v1208 = vsel %vm1206, 1, 0
  %v1209 = vsel %vm1207, 1, 0
  %vm1210 = vcmp.eq.s32.totalorder %v1208, 1
  %vm1211 = vcmp.eq.s32.totalorder %v1209, 1
  %v1212 = vsel %vm1210, %v1204, 0.0
  %v1213 = vsel %vm1211, %v1205, 0.0
  %v1214 = vadd.f32 %v1212, %v1213
  %1215 = vadd.xlane.f32.xlu0 %v1214
  %v1216 = vpop.xlane.xlu0 %1215
  %v1217 = vmul.f32 %v1216, 0.03125
  %v1218 = vsub.f32 %v1204, %v1217
  %v1219 = vsub.f32 %v1205, %v1217
  %v1220 = vsel %vm1210, %v1218, 0.0
  %v1221 = vsel %vm1211, %v1219, 0.0
  %v1222 = vmul.f32 %v1220, %v1220
  %v1223 = vmul.f32 %v1221, %v1221
  %v1224 = vadd.f32 %v1222, %v1223
  %1225 = vadd.xlane.f32.xlu0 %v1224
  %v1226 = vpop.xlane.xlu0 %1225
  %v1227 = vmul.f32 %v1226, 0.03125
  %v1228 = vadd.f32 %v1227, 1e-05
  %v1229 = vrsqrt.pop %v1228
  %v1230 = vmul.f32 %v1229, %v28
  %1232 = vset.pattern.permute.xlu0 4
  %1233 = vperm.xlu0 %1232, %v1230
  %v1234 = vpop.permute.xlu0 %1233
  %v1236 = vmul.f32 %v1220, %v1234
  %v1237 = vmul.f32 %v1221, %v1234
  %1238 = vset.pattern.permute.xlu0 5
  %1239 = vperm.xlu0 %1238, %v28
  %v1240 = vpop.permute.xlu0 %1239
  %v1242 = vadd.f32 %v1236, %v1240
  %v1243 = vadd.f32 %v1237, %v1240
  %v1244 = vsel %vm1210, %v1242, 0.0
  %v1245 = vsel %vm1211, %v1243, 0.0
  %v1246 = vpack.c.bf16 %v1244, %v1244
  %v1247 = vpack.c.bf16 %v1245, %v1245
  %1248 = vmatprep.subr.bf16.mxu0 %v513
  %1249 = vmatpush1.bf16.msra.mxu0 %v512
  %1250 = vmatprep.subr.bf16.mxu0 %v517
  %1251 = vmatpush1.bf16.msra.mxu0 %v516
  %1252 = vmatprep.subr.bf16.mxu0 %v521
  %1253 = vmatpush1.bf16.msra.mxu0 %v520
  %1254 = vmatprep.subr.bf16.mxu0 %v525
  %1255 = vmatpush1.bf16.msra.mxu0 %v524
  %1256 = vmatprep.subr.bf16.mxu0 %v529
  %1257 = vmatpush1.bf16.msra.mxu0 %v528
  %1258 = vmatprep.subr.bf16.mxu0 %v533
  %1259 = vmatpush1.bf16.msra.mxu0 %v532
  %1260 = vmatprep.subr.bf16.mxu0 %v537
  %1261 = vmatpush1.bf16.msra.mxu0 %v536
  %1262 = vmatprep.subr.bf16.mxu0 %v541
  %1263 = vmatpush1.bf16.msra.mxu0 %v540
  %1264 = vmatprep.subr.bf16.mxu0 %v545
  %1265 = vmatpush1.bf16.msra.mxu0 %v544
  %1266 = vmatprep.subr.bf16.mxu0 %v549
  %1267 = vmatpush1.bf16.msra.mxu0 %v548
  %1268 = vmatprep.subr.bf16.mxu0 %v553
  %1269 = vmatpush1.bf16.msra.mxu0 %v552
  %1270 = vmatprep.subr.bf16.mxu0 %v557
  %1271 = vmatpush1.bf16.msra.mxu0 %v556
  %1272 = vmatprep.subr.bf16.mxu0 %v561
  %1273 = vmatpush1.bf16.msra.mxu0 %v560
  %1274 = vmatprep.subr.bf16.mxu0 %v565
  %1275 = vmatpush1.bf16.msra.mxu0 %v564
  %1276 = vmatprep.subr.bf16.mxu0 %v569
  %1277 = vmatpush1.bf16.msra.mxu0 %v568
  %1278 = vmatprep.subr.bf16.mxu0 %v573
  %1279 = vmatpush1.bf16.msra.mxu0 %v572
  %1280 = vmatprep.mubr.bf16.mxu0 %v1247
  %1281 = vmatmul.mubr.bf16.gmra.mrb[0].mxu0 %v1246
  %v1282 = vpop.f32.mrb[0].mxu0
  %v1283 = vadd.f32 0.0, %v1282
  %v1284 = vpop.f32.mrb[0].mxu0
  %v1285 = vadd.f32 0.0, %v1284
  %v1286 = vpop.f32.mrb[0].mxu0
  %v1287 = vpop.f32.mrb[0].mxu0
  %1288 = vdwg.mxu0
  %1289 = vmatprep.subr.bf16.mxu0 %v515
  %1290 = vmatpush1.bf16.msra.mxu0 %v514
  %1291 = vmatprep.subr.bf16.mxu0 %v519
  %1292 = vmatpush1.bf16.msra.mxu0 %v518
  %1293 = vmatprep.subr.bf16.mxu0 %v523
  %1294 = vmatpush1.bf16.msra.mxu0 %v522
  %1295 = vmatprep.subr.bf16.mxu0 %v527
  %1296 = vmatpush1.bf16.msra.mxu0 %v526
  %1297 = vmatprep.subr.bf16.mxu0 %v531
  %1298 = vmatpush1.bf16.msra.mxu0 %v530
  %1299 = vmatprep.subr.bf16.mxu0 %v535
  %1300 = vmatpush1.bf16.msra.mxu0 %v534
  %1301 = vmatprep.subr.bf16.mxu0 %v539
  %1302 = vmatpush1.bf16.msra.mxu0 %v538
  %1303 = vmatprep.subr.bf16.mxu0 %v543
  %1304 = vmatpush1.bf16.msra.mxu0 %v542
  %1305 = vmatprep.subr.bf16.mxu0 %v547
  %1306 = vmatpush1.bf16.msra.mxu0 %v546
  %1307 = vmatprep.subr.bf16.mxu0 %v551
  %1308 = vmatpush1.bf16.msra.mxu0 %v550
  %1309 = vmatprep.subr.bf16.mxu0 %v555
  %1310 = vmatpush1.bf16.msra.mxu0 %v554
  %1311 = vmatprep.subr.bf16.mxu0 %v559
  %1312 = vmatpush1.bf16.msra.mxu0 %v558
  %1313 = vmatprep.subr.bf16.mxu0 %v563
  %1314 = vmatpush1.bf16.msra.mxu0 %v562
  %1315 = vmatprep.subr.bf16.mxu0 %v567
  %1316 = vmatpush1.bf16.msra.mxu0 %v566
  %1317 = vmatprep.subr.bf16.mxu0 %v571
  %1318 = vmatpush1.bf16.msra.mxu0 %v570
  %1319 = vmatprep.subr.bf16.mxu0 %v575
  %1320 = vmatpush1.bf16.msra.mxu0 %v574
  %1321 = vmatprep.mubr.bf16.mxu0 %v1247
  %1322 = vmatmul.mubr.bf16.gmra.mrb[0].mxu0 %v1246
  %v1323 = vpop.f32.mrb[0].mxu0
  %v1324 = vadd.f32 0.0, %v1323
  %v1325 = vpop.f32.mrb[0].mxu0
  %v1326 = vadd.f32 0.0, %v1325
  %v1327 = vpop.f32.mrb[0].mxu0
  %v1328 = vpop.f32.mrb[0].mxu0
  %1329 = vdwg.mxu0
  %v1330 = vmax.f32 %v1283, %v1324
  %v1331 = vmax.f32 %v1285, %v1326
  %v1332 = vmax.f32 %v1330, 0.0
  %v1333 = vmax.f32 %v1331, 0.0
  %v1334 = vpack.c.bf16 %v1332, %v1332
  %v1335 = vpack.c.bf16 %v1333, %v1333
  %v1336 = vld [vmem:[%s1 + $0x3c] sm:$0xf]
  %v1337 = vld [vmem:[%s1 + $0x40] sm:$0xf]
  %v1338 = vld [vmem:[%s1 + $0x44] sm:$0xf]
  %v1339 = vld [vmem:[%s1 + $0x48] sm:$0xf]
  %v1340 = vld [vmem:[%s1 + $0x4c] sm:$0xf]
  %v1346 = vunpack.c.l.b16 %v1336
  %v1347 = vunpack.c.l.b16 %v1337
  %v1348 = vunpack.c.l.b16 %v1338
  %v1349 = vunpack.c.l.b16 %v1339
  %v1350 = vunpack.c.l.b16 %v1340
  %v1351 = vpack.c.b16 %v1347, %v1346
  %v1352 = vpack.c.b16 %v1349, %v1348
  %v1353 = vpack.c.b16 %v1350, %v1350
  %v1355 = vsel %vm115, %v1351, 0
  %v1358 = vsel %vm115, %v1352, 0
  %v1361 = vsel %vm115, %v1353, 0
  %v1364 = vsel %vm125, %v1334, 0
  %v1367 = vsel %vm125, %v1335, 0
  %1369 = vmatprep.subr.bf16.mxu0 %v1367
  %1370 = vmatpush1.bf16.msra.mxu0 %v1364
  %1371 = vmatprep.subr.bf16.mxu0 0
  %1372 = vmatpush1.bf16.msra.mxu0 0
  %1373 = vmatprep.subr.bf16.mxu0 0
  %1374 = vmatpush1.bf16.msra.mxu0 0
  %1375 = vmatprep.subr.bf16.mxu0 0
  %1376 = vmatpush1.bf16.msra.mxu0 0
  %1377 = vmatprep.subr.bf16.mxu0 0
  %1378 = vmatpush1.bf16.msra.mxu0 0
  %1379 = vmatprep.subr.bf16.mxu0 0
  %1380 = vmatpush1.bf16.msra.mxu0 0
  %1381 = vmatprep.subr.bf16.mxu0 0
  %1382 = vmatpush1.bf16.msra.mxu0 0
  %1383 = vmatprep.subr.bf16.mxu0 0
  %1384 = vmatpush1.bf16.msra.mxu0 0
  %1385 = vmatprep.subr.bf16.mxu0 0
  %1386 = vmatpush1.bf16.msra.mxu0 0
  %1387 = vmatprep.subr.bf16.mxu0 0
  %1388 = vmatpush1.bf16.msra.mxu0 0
  %1389 = vmatprep.subr.bf16.mxu0 0
  %1390 = vmatpush1.bf16.msra.mxu0 0
  %1391 = vmatprep.subr.bf16.mxu0 0
  %1392 = vmatpush1.bf16.msra.mxu0 0
  %1393 = vmatprep.subr.bf16.mxu0 0
  %1394 = vmatpush1.bf16.msra.mxu0 0
  %1395 = vmatprep.subr.bf16.mxu0 0
  %1396 = vmatpush1.bf16.msra.mxu0 0
  %1397 = vmatprep.subr.bf16.mxu0 0
  %1398 = vmatpush1.bf16.msra.mxu0 0
  %1399 = vmatprep.subr.bf16.mxu0 0
  %1400 = vmatpush1.bf16.msra.mxu0 0
  %1401 = vmatprep.mubr.bf16.mxu0 0
  %1402 = vmatmul.mubr.bf16.gmra.mrb[0].mxu0 %v1355
  %v1403 = vpop.f32.mrb[0].mxu0
  %v1404 = vadd.f32 0.0, %v1403
  %v1405 = vpop.f32.mrb[0].mxu0
  %v1406 = vadd.f32 0.0, %v1405
  %v1407 = vpop.f32.mrb[0].mxu0
  %v1408 = vadd.f32 0.0, %v1407
  %v1409 = vpop.f32.mrb[0].mxu0
  %v1410 = vadd.f32 0.0, %v1409
  %1411 = vmatprep.mubr.bf16.mxu0 0
  %1412 = vmatmul.mubr.bf16.gmra.mrb[0].mxu0 %v1358
  %v1413 = vpop.f32.mrb[0].mxu0
  %v1414 = vadd.f32 0.0, %v1413
  %v1415 = vpop.f32.mrb[0].mxu0
  %v1416 = vadd.f32 0.0, %v1415
  %v1417 = vpop.f32.mrb[0].mxu0
  %v1418 = vadd.f32 0.0, %v1417
  %v1419 = vpop.f32.mrb[0].mxu0
  %v1420 = vadd.f32 0.0, %v1419
  %1421 = vmatprep.mubr.bf16.mxu0 0
  %1422 = vmatmul.mubr.bf16.gmra.mrb[0].mxu0 %v1361
  %v1423 = vpop.f32.mrb[0].mxu0
  %v1424 = vadd.f32 0.0, %v1423
  %v1425 = vpop.f32.mrb[0].mxu0
  %v1426 = vadd.f32 0.0, %v1425
  %v1427 = vpop.f32.mrb[0].mxu0
  %v1428 = vpop.f32.mrb[0].mxu0
  %1429 = vdwg.mxu0
  %1430 = vst [vmem:[#allocation2 + $0x18] sm:$0xff] %v1408
  %1431 = vst [vmem:[#allocation2 + $0x20] sm:$0xff] %v1410
  %1432 = vst [vmem:[#allocation2 + $0x30] sm:$0xff] %v1414
  %1433 = vst [vmem:[#allocation2 + $0x38] sm:$0xff] %v1416
  %1434 = vst [vmem:[#allocation2 + $0x48] sm:$0xff] %v1418
  %1435 = vst [vmem:[#allocation2 + $0x50] sm:$0xff] %v1420
  %1436 = vst [vmem:[#allocation2 + $0x60] sm:$0xff] %v1424
  %1437 = vst [vmem:[#allocation2 + $0x68] sm:$0xff] %v1426
  %v1438 = vld [vmem:[#allocation2 + $0x18] sm:$0xff]
  %v1439 = vld [vmem:[#allocation2 + $0x20] sm:$0xff]
  %v1440 = vld [vmem:[#allocation2 + $0x28] sm:$0xff]
  %1444 = vrot.lane.b32.xlu0 %v1438, 127
  %v1445 = vpop.permute.xlu0 %1444
  %1446 = vrot.lane.b32.xlu0 %v1439, 127
  %v1447 = vpop.permute.xlu0 %1446
  %1448 = vrot.lane.b32.xlu0 %v1440, 127
  %v1449 = vpop.permute.xlu0 %1448
  %v1450 = vsel %vm213, %v1445, %v1447
  %v1451 = vsel %vm213, %v1447, %v1449
  %v1454 = vadd.f32 %v1404, %v1450
  %v1455 = vadd.f32 %v1406, %v1451
  %v1456 = vld [vmem:[#allocation2 + $0x30] sm:$0xff]
  %v1457 = vld [vmem:[#allocation2 + $0x38] sm:$0xff]
  %v1458 = vld [vmem:[#allocation2 + $0x40] sm:$0xff]
  %1462 = vrot.lane.b32.xlu0 %v1456, 126
  %v1463 = vpop.permute.xlu0 %1462
  %1464 = vrot.lane.b32.xlu0 %v1457, 126
  %v1465 = vpop.permute.xlu0 %1464
  %1466 = vrot.lane.b32.xlu0 %v1458, 126
  %v1467 = vpop.permute.xlu0 %1466
  %v1468 = vsel %vm232, %v1463, %v1465
  %v1469 = vsel %vm232, %v1465, %v1467
  %v1472 = vadd.f32 %v1454, %v1468
  %v1473 = vadd.f32 %v1455, %v1469
  %v1474 = vld [vmem:[#allocation2 + $0x48] sm:$0xff]
  %v1475 = vld [vmem:[#allocation2 + $0x50] sm:$0xff]
  %v1476 = vld [vmem:[#allocation2 + $0x58] sm:$0xff]
  %1480 = vrot.lane.b32.xlu0 %v1474, 125
  %v1481 = vpop.permute.xlu0 %1480
  %1482 = vrot.lane.b32.xlu0 %v1475, 125
  %v1483 = vpop.permute.xlu0 %1482
  %1484 = vrot.lane.b32.xlu0 %v1476, 125
  %v1485 = vpop.permute.xlu0 %1484
  %v1486 = vsel %vm251, %v1481, %v1483
  %v1487 = vsel %vm251, %v1483, %v1485
  %v1490 = vadd.f32 %v1472, %v1486
  %v1491 = vadd.f32 %v1473, %v1487
  %v1492 = vld [vmem:[#allocation2 + $0x60] sm:$0xff]
  %v1493 = vld [vmem:[#allocation2 + $0x68] sm:$0xff]
  %v1494 = vld [vmem:[#allocation2 + $0x70] sm:$0xff]
  %1498 = vrot.lane.b32.xlu0 %v1492, 124
  %v1499 = vpop.permute.xlu0 %1498
  %1500 = vrot.lane.b32.xlu0 %v1493, 124
  %v1501 = vpop.permute.xlu0 %1500
  %1502 = vrot.lane.b32.xlu0 %v1494, 124
  %v1503 = vpop.permute.xlu0 %1502
  %v1504 = vsel %vm270, %v1499, %v1501
  %v1505 = vsel %vm270, %v1501, %v1503
  %v1508 = vadd.f32 %v1490, %v1504
  %v1509 = vadd.f32 %v1491, %v1505
  %vm1510 = vcmp.lt.s32.totalorder %v26, 8
  %vm1511 = vcmp.lt.s32.totalorder %v27, 8
  %v1512 = vsel %vm1510, 1, 0
  %v1513 = vsel %vm1511, 1, 0
  %vm1514 = vcmp.eq.s32.totalorder %v1512, 1
  %vm1515 = vcmp.eq.s32.totalorder %v1513, 1
  %v1516 = vsel %vm1514, %v1508, 0.0
  %v1517 = vsel %vm1515, %v1509, 0.0
  %v1518 = vadd.f32 %v1516, %v1517
  %1519 = vadd.xlane.f32.xlu0 %v1518
  %v1520 = vpop.xlane.xlu0 %1519
  %v1521 = vmul.f32 %v1520, 0.0625
  %v1522 = vsub.f32 %v1508, %v1521
  %v1523 = vsub.f32 %v1509, %v1521
  %v1524 = vsel %vm1514, %v1522, 0.0
  %v1525 = vsel %vm1515, %v1523, 0.0
  %v1526 = vmul.f32 %v1524, %v1524
  %v1527 = vmul.f32 %v1525, %v1525
  %v1528 = vadd.f32 %v1526, %v1527
  %1529 = vadd.xlane.f32.xlu0 %v1528
  %v1530 = vpop.xlane.xlu0 %1529
  %v1531 = vmul.f32 %v1530, 0.0625
  %v1532 = vadd.f32 %v1531, 1e-05
  %v1533 = vrsqrt.pop %v1532
  %v1534 = vmul.f32 %v1533, %v28
  %1536 = vset.pattern.permute.xlu0 6
  %1537 = vperm.xlu0 %1536, %v1534
  %v1538 = vpop.permute.xlu0 %1537
  %v1540 = vmul.f32 %v1524, %v1538
  %v1541 = vmul.f32 %v1525, %v1538
  %1542 = vset.pattern.permute.xlu0 7
  %1543 = vperm.xlu0 %1542, %v28
  %v1544 = vpop.permute.xlu0 %1543
  %v1546 = vadd.f32 %v1540, %v1544
  %v1547 = vadd.f32 %v1541, %v1544
  %v1548 = vsel %vm1514, %v1546, 0.0
  %v1549 = vsel %vm1515, %v1547, 0.0
  %v1550 = vpack.c.bf16 %v1548, %v1548
  %v1551 = vpack.c.bf16 %v1549, %v1549
  %1552 = vmatprep.subr.bf16.mxu0 %v513
  %1553 = vmatpush1.bf16.msra.mxu0 %v512
  %1554 = vmatprep.subr.bf16.mxu0 %v517
  %1555 = vmatpush1.bf16.msra.mxu0 %v516
  %1556 = vmatprep.subr.bf16.mxu0 %v521
  %1557 = vmatpush1.bf16.msra.mxu0 %v520
  %1558 = vmatprep.subr.bf16.mxu0 %v525
  %1559 = vmatpush1.bf16.msra.mxu0 %v524
  %1560 = vmatprep.subr.bf16.mxu0 %v529
  %1561 = vmatpush1.bf16.msra.mxu0 %v528
  %1562 = vmatprep.subr.bf16.mxu0 %v533
  %1563 = vmatpush1.bf16.msra.mxu0 %v532
  %1564 = vmatprep.subr.bf16.mxu0 %v537
  %1565 = vmatpush1.bf16.msra.mxu0 %v536
  %1566 = vmatprep.subr.bf16.mxu0 %v541
  %1567 = vmatpush1.bf16.msra.mxu0 %v540
  %1568 = vmatprep.subr.bf16.mxu0 %v545
  %1569 = vmatpush1.bf16.msra.mxu0 %v544
  %1570 = vmatprep.subr.bf16.mxu0 %v549
  %1571 = vmatpush1.bf16.msra.mxu0 %v548
  %1572 = vmatprep.subr.bf16.mxu0 %v553
  %1573 = vmatpush1.bf16.msra.mxu0 %v552
  %1574 = vmatprep.subr.bf16.mxu0 %v557
  %1575 = vmatpush1.bf16.msra.mxu0 %v556
  %1576 = vmatprep.subr.bf16.mxu0 %v561
  %1577 = vmatpush1.bf16.msra.mxu0 %v560
  %1578 = vmatprep.subr.bf16.mxu0 %v565
  %1579 = vmatpush1.bf16.msra.mxu0 %v564
  %1580 = vmatprep.subr.bf16.mxu0 %v569
  %1581 = vmatpush1.bf16.msra.mxu0 %v568
  %1582 = vmatprep.subr.bf16.mxu0 %v573
  %1583 = vmatpush1.bf16.msra.mxu0 %v572
  %1584 = vmatprep.mubr.bf16.mxu0 %v1551
  %1585 = vmatmul.mubr.bf16.gmra.mrb[0].mxu0 %v1550
  %v1586 = vpop.f32.mrb[0].mxu0
  %v1587 = vadd.f32 0.0, %v1586
  %v1588 = vpop.f32.mrb[0].mxu0
  %v1589 = vadd.f32 0.0, %v1588
  %v1590 = vpop.f32.mrb[0].mxu0
  %v1591 = vpop.f32.mrb[0].mxu0
  %1592 = vdwg.mxu0
  %1593 = vmatprep.subr.bf16.mxu0 %v515
  %1594 = vmatpush1.bf16.msra.mxu0 %v514
  %1595 = vmatprep.subr.bf16.mxu0 %v519
  %1596 = vmatpush1.bf16.msra.mxu0 %v518
  %1597 = vmatprep.subr.bf16.mxu0 %v523
  %1598 = vmatpush1.bf16.msra.mxu0 %v522
  %1599 = vmatprep.subr.bf16.mxu0 %v527
  %1600 = vmatpush1.bf16.msra.mxu0 %v526
  %1601 = vmatprep.subr.bf16.mxu0 %v531
  %1602 = vmatpush1.bf16.msra.mxu0 %v530
  %1603 = vmatprep.subr.bf16.mxu0 %v535
  %1604 = vmatpush1.bf16.msra.mxu0 %v534
  %1605 = vmatprep.subr.bf16.mxu0 %v539
  %1606 = vmatpush1.bf16.msra.mxu0 %v538
  %1607 = vmatprep.subr.bf16.mxu0 %v543
  %1608 = vmatpush1.bf16.msra.mxu0 %v542
  %1609 = vmatprep.subr.bf16.mxu0 %v547
  %1610 = vmatpush1.bf16.msra.mxu0 %v546
  %1611 = vmatprep.subr.bf16.mxu0 %v551
  %1612 = vmatpush1.bf16.msra.mxu0 %v550
  %1613 = vmatprep.subr.bf16.mxu0 %v555
  %1614 = vmatpush1.bf16.msra.mxu0 %v554
  %1615 = vmatprep.subr.bf16.mxu0 %v559
  %1616 = vmatpush1.bf16.msra.mxu0 %v558
  %1617 = vmatprep.subr.bf16.mxu0 %v563
  %1618 = vmatpush1.bf16.msra.mxu0 %v562
  %1619 = vmatprep.subr.bf16.mxu0 %v567
  %1620 = vmatpush1.bf16.msra.mxu0 %v566
  %1621 = vmatprep.subr.bf16.mxu0 %v571
  %1622 = vmatpush1.bf16.msra.mxu0 %v570
  %1623 = vmatprep.subr.bf16.mxu0 %v575
  %1624 = vmatpush1.bf16.msra.mxu0 %v574
  %1625 = vmatprep.mubr.bf16.mxu0 %v1551
  %1626 = vmatmul.mubr.bf16.gmra.mrb[0].mxu0 %v1550
  %v1627 = vpop.f32.mrb[0].mxu0
  %v1628 = vadd.f32 0.0, %v1627
  %v1629 = vpop.f32.mrb[0].mxu0
  %v1630 = vadd.f32 0.0, %v1629
  %v1631 = vpop.f32.mrb[0].mxu0
  %v1632 = vpop.f32.mrb[0].mxu0
  %1633 = vdwg.mxu0
  %v1634 = vmax.f32 %v1587, %v1628
  %v1635 = vmax.f32 %v1589, %v1630
  %v1636 = vmax.f32 %v1634, 0.0
  %v1637 = vmax.f32 %v1635, 0.0
  %1638 = vst [vmem:[%s4] sm:$0xff] %v1636
  %1639 = vst [vmem:[%s4 + $0x8] sm:$0xff] %v1637
  // Predicated region
  $region18: #{feature_extractor_cnn.1} parent=0 // pred_check
    _
  $region19: #{feature_extractor_cnn.1} parent=0 // pred_check_branch
    %1641 = sbr.rel (0) target = $region21
  $region20: #{feature_extractor_cnn.1} parent=0 // pred_region
    _
  $region21: #{feature_extractor_cnn.1} parent=0 // pred_fallthru
    _
  // Predicated region
  $region22: #{feature_extractor_cnn.1} parent=0 // pred_check
    _
  $region23: #{feature_extractor_cnn.1} parent=0 // pred_check_branch
    %1643 = sbr.rel (0) target = $region25
  $region24: #{feature_extractor_cnn.1} parent=0 // pred_region
    _
  $region25: #{feature_extractor_cnn.1} parent=0 // pred_fallthru
    _

</llo_original>
